<compile_context>
chip_gen: v7x
topology: tpu7x:2x2x1
jax: 0.10.0
libtpu: 0.0.40
codegen_flags: <defaults>
</compile_context>

<pallas_src>
import math

import jax
import jax.numpy as jnp
from jax.experimental import pallas as pl
from jax.experimental.pallas import tpu as pltpu


def _fft2_real_kernel(x_ref, ch_ref, nsh_ref, cs_ref, ss_ref, o_ref):
    tb, s, h = x_ref.shape
    cdt = ch_ref.dtype

    ch = ch_ref[...]     # (H, H)  =  C_H
    nsh = nsh_ref[...]   # (H, H)  = -S_H
    cs = cs_ref[...]     # (S, S)  =  C_S
    ss = ss_ref[...]     # (S, S)  =  S_S

    # Stage A (hidden axis): one flattened matmul pair over all TB*S rows.
    # Weight pushes are amortized over TB*S rows; no concat / sublane slicing.
    xf = x_ref[...].astype(cdt).reshape(tb * s, h)                    # (TB*S, H)
    yc = jnp.dot(xf, ch, preferred_element_type=jnp.float32).astype(cdt)
    ys = jnp.dot(xf, nsh, preferred_element_type=jnp.float32).astype(cdt)

    # Stage B (sequence axis): per batch element, fp32 MXU accumulation.
    for b in range(tb):  # tb is small and static -> unrolled
        rows = slice(b * s, (b + 1) * s)
        ob = jnp.dot(cs, yc[rows], preferred_element_type=jnp.float32)
        ob = ob + jnp.dot(ss, ys[rows], preferred_element_type=jnp.float32)
        o_ref[b] = ob.astype(o_ref.dtype)


def _dft_cos_sin(n: int):
    # Exact (k*m) mod n in int32 before scaling by 2*pi/n keeps the angles
    # accurate for large n.  The int32 product is exact for n <= 46340.
    k = jnp.arange(n, dtype=jnp.int32)
    km = (k[:, None] * k[None, :]) % n
    ang = (2.0 * jnp.pi / n) * km.astype(jnp.float32)
    return jnp.cos(ang), jnp.sin(ang)


def _choose_tb(B, S, H, io_bytes, c_bytes, budget_bytes):
    """Largest divisor TB of B whose working set fits the VMEM budget,
    preferring >= 2 grid steps so both TensorCores get work on v7x."""
    const_bytes = 2 * (S * S + H * H) * c_bytes           # single-buffered consts
    best = 1
    for tb in range(1, B + 1):
        if B % tb:
            continue
        blk = tb * S * H
        need = (const_bytes
                + 2 * 2 * blk * io_bytes                  # double-buffered in + out
                + blk * (3 * c_bytes + 2 * 4))            # Xf cast + Yc/Ys (f32 + cdt)
        if need > budget_bytes:
            continue
        if B // tb >= 2 and tb > best:
            best = tb
    return best


def fourier_transform(x: jax.Array, *, compute_dtype=None) -> jax.Array:
    """Pallas implementation of torch.fft.fft2(x, dim=(-2, -1)).real for real x."""
    assert x.ndim >= 2, "expected at least 2 dims (..., S, H)"
    # TODO(synk): complex inputs (also accepted by torch.fft.fft2) are not
    # handled; FNet only feeds real activations through this module.
    assert jnp.issubdtype(x.dtype, jnp.floating)
    *lead, S, H = x.shape
    B = math.prod(lead) if lead else 1
    xb = x.reshape(B, S, H)

    if compute_dtype is None:
        # bf16 MXU operands for bf16 models; fp32 operands for fp32 inputs.
        compute_dtype = jnp.bfloat16 if x.dtype == jnp.bfloat16 else jnp.float32
    cdt = jnp.dtype(compute_dtype)

    cos_s, sin_s = _dft_cos_sin(S)
    cos_h, sin_h = _dft_cos_sin(H)
    cs = cos_s.astype(cdt)          # (S, S)
    ss = sin_s.astype(cdt)          # (S, S)
    ch = cos_h.astype(cdt)          # (H, H)
    nsh = (-sin_h).astype(cdt)      # (H, H)

    io_bytes = x.dtype.itemsize
    TB = _choose_tb(B, S, H, io_bytes, cdt.itemsize, budget_bytes=40 << 20)
    grid = (B // TB,)

    flops = 4 * B * S * H * (S + H)
    bytes_accessed = (2 * B * S * H * io_bytes
                      + 2 * (S * S + H * H) * cdt.itemsize)

    def _run(single_buffer_consts: bool):
        const_kw = ({"pipeline_mode": pl.Buffered(1)}
                    if single_buffer_consts else {})
        grid_spec = pltpu.PrefetchScalarGridSpec(
            num_scalar_prefetch=0,
            grid=grid,
            in_specs=[
                pl.BlockSpec((TB, S, H), lambda i: (i, 0, 0)),           # x
                pl.BlockSpec((H, H), lambda i: (0, 0), **const_kw),      # C_H
                pl.BlockSpec((H, H), lambda i: (0, 0), **const_kw),      # -S_H
                pl.BlockSpec((S, S), lambda i: (0, 0), **const_kw),      # C_S
                pl.BlockSpec((S, S), lambda i: (0, 0), **const_kw),      # S_S
            ],
            out_specs=pl.BlockSpec((TB, S, H), lambda i: (i, 0, 0)),
        )
        return pl.pallas_call(
            _fft2_real_kernel,
            out_shape=jax.ShapeDtypeStruct((B, S, H), x.dtype),
            grid_spec=grid_spec,
            compiler_params=pltpu.CompilerParams(
                dimension_semantics=("parallel",),
                vmem_limit_bytes=64 * 1024 * 1024,
            ),
            cost_estimate=pl.CostEstimate(
                flops=int(flops),
                transcendentals=0,
                bytes_accessed=int(bytes_accessed),
            ),
        )(xb, ch, nsh, cs, ss)

    try:
        out = _run(True)
    except Exception:
        # Fallback for environments where BlockSpec pipeline_mode /
        # single-buffering is unavailable; only costs a little extra VMEM.
        out = _run(False)

    return out.reshape(x.shape)


if __name__ == "__main__":
    key = jax.random.PRNGKey(0)
    k1, k2 = jax.random.split(key)

    # FNet-style layout: (batch, seq_len, hidden).
    B, S, H = 2, 8, 32
    x = jax.random.normal(k1, (B, S, H), dtype=jnp.float32)
    out = jax.block_until_ready(fourier_transform(x))
    ref = jnp.fft.fft2(x, axes=(-2, -1)).real
    assert out.shape == ref.shape and out.dtype == x.dtype
    assert jnp.allclose(out, ref, rtol=1e-2, atol=1e-2), "mismatch vs jnp.fft.fft2"

    # Second shape exercises the multi-batch-per-grid-step (TB > 1) path.
    B2, S2, H2 = 4, 16, 64
    x2 = jax.random.normal(k2, (B2, S2, H2), dtype=jnp.float32)
    out2 = jax.block_until_ready(fourier_transform(x2))
    ref2 = jnp.fft.fft2(x2, axes=(-2, -1)).real
    assert jnp.allclose(out2, ref2, rtol=1e-2, atol=1e-2), "mismatch vs jnp.fft.fft2"

    print("KERNEL_OK")
</pallas_src>

<mosaic_0001>
module attributes {stable_mosaic.version = 11 : i64} {
  func.func @_fft2_real_kernel(%arg0: i32, %arg1: memref<1x8x32xf32, #tpu.memory_space<vmem>>, %arg2: memref<32x32xf32, #tpu.memory_space<vmem>>, %arg3: memref<32x32xf32, #tpu.memory_space<vmem>>, %arg4: memref<8x8xf32, #tpu.memory_space<vmem>>, %arg5: memref<8x8xf32, #tpu.memory_space<vmem>>, %arg6: memref<1x8x32xf32, #tpu.memory_space<vmem>>) attributes {dimension_semantics = [#tpu.dimension_semantics<parallel>], iteration_bounds = array<i64: 2>, scalar_prefetch = 0 : i64, scratch_operands = 0 : i64, tpu.core_type = #tpu.core_type<tc>, window_params = [{transform_indices = @transform_0, window_bounds = array<i64: 1, 8, 32>}, {pipeline_mode = #tpu.pipeline_mode<synchronous>, transform_indices = @transform_1, window_bounds = array<i64: 32, 32>}, {pipeline_mode = #tpu.pipeline_mode<synchronous>, transform_indices = @transform_2, window_bounds = array<i64: 32, 32>}, {pipeline_mode = #tpu.pipeline_mode<synchronous>, transform_indices = @transform_3, window_bounds = array<i64: 8, 8>}, {pipeline_mode = #tpu.pipeline_mode<synchronous>, transform_indices = @transform_4, window_bounds = array<i64: 8, 8>}, {transform_indices = @transform_5, window_bounds = array<i64: 1, 8, 32>}]} {
    %c0 = arith.constant 0 : index
    %c0_0 = arith.constant 0 : index
    %0 = vector.load %arg2[%c0, %c0_0] : memref<32x32xf32, #tpu.memory_space<vmem>>, vector<32x32xf32>
    %c0_1 = arith.constant 0 : index
    %c0_2 = arith.constant 0 : index
    %1 = vector.load %arg3[%c0_1, %c0_2] : memref<32x32xf32, #tpu.memory_space<vmem>>, vector<32x32xf32>
    %c0_3 = arith.constant 0 : index
    %c0_4 = arith.constant 0 : index
    %2 = vector.load %arg4[%c0_3, %c0_4] : memref<8x8xf32, #tpu.memory_space<vmem>>, vector<8x8xf32>
    %c0_5 = arith.constant 0 : index
    %c0_6 = arith.constant 0 : index
    %3 = vector.load %arg5[%c0_5, %c0_6] : memref<8x8xf32, #tpu.memory_space<vmem>>, vector<8x8xf32>
    %c0_7 = arith.constant 0 : index
    %c0_8 = arith.constant 0 : index
    %c0_9 = arith.constant 0 : index
    %4 = vector.load %arg1[%c0_7, %c0_8, %c0_9] : memref<1x8x32xf32, #tpu.memory_space<vmem>>, vector<1x8x32xf32>
    %5 = vector.shape_cast %4 : vector<1x8x32xf32> to vector<8x32xf32>
    %cst = arith.constant dense<0.000000e+00> : vector<8x32xf32>
    %6 = tpu.matmul %5, %0, %cst {dimension_numbers = #tpu.dot_dimension_numbers<[1], [0], [0], [1], [0, 0, 1, 1], [], []>} : vector<8x32xf32>, vector<32x32xf32>, vector<8x32xf32> -> vector<8x32xf32>
    %cst_10 = arith.constant dense<0.000000e+00> : vector<8x32xf32>
    %7 = tpu.matmul %5, %1, %cst_10 {dimension_numbers = #tpu.dot_dimension_numbers<[1], [0], [0], [1], [0, 0, 1, 1], [], []>} : vector<8x32xf32>, vector<32x32xf32>, vector<8x32xf32> -> vector<8x32xf32>
    %cst_11 = arith.constant dense<0.000000e+00> : vector<8x32xf32>
    %8 = tpu.matmul %2, %6, %cst_11 {dimension_numbers = #tpu.dot_dimension_numbers<[1], [0], [0], [1], [0, 0, 1, 1], [], []>} : vector<8x8xf32>, vector<8x32xf32>, vector<8x32xf32> -> vector<8x32xf32>
    %cst_12 = arith.constant dense<0.000000e+00> : vector<8x32xf32>
    %9 = tpu.matmul %3, %7, %cst_12 {dimension_numbers = #tpu.dot_dimension_numbers<[1], [0], [0], [1], [0, 0, 1, 1], [], []>} : vector<8x8xf32>, vector<8x32xf32>, vector<8x32xf32> -> vector<8x32xf32>
    %10 = arith.addf %8, %9 : vector<8x32xf32>
    %c0_13 = arith.constant 0 : index
    %c0_14 = arith.constant 0 : index
    %c0_15 = arith.constant 0 : index
    %11 = vector.load %arg6[%c0_13, %c0_14, %c0_15] : memref<1x8x32xf32, #tpu.memory_space<vmem>>, vector<1x8x32xf32>
    %12 = vector.shape_cast %11 : vector<1x8x32xf32> to vector<8x32xf32>
    %13 = vector.shape_cast %10 : vector<8x32xf32> to vector<1x8x32xf32>
    tpu.vector_store %arg6[%c0_13, %c0_14, %c0_15], %13 {strides = array<i32>} : memref<1x8x32xf32, #tpu.memory_space<vmem>>, vector<1x8x32xf32>,
    return
  }
  func.func @transform_0(%arg0: i32) -> (i32, i32, i32) {
    %c0_i32 = arith.constant 0 : i32
    %c0_i32_0 = arith.constant 0 : i32
    %c0_i32_1 = arith.constant 0 : i32
    return %arg0, %c0_i32, %c0_i32_0 : i32, i32, i32
  }
  func.func @transform_1(%arg0: i32) -> (i32, i32) {
    %c0_i32 = arith.constant 0 : i32
    %c0_i32_0 = arith.constant 0 : i32
    %c0_i32_1 = arith.constant 0 : i32
    return %c0_i32, %c0_i32_0 : i32, i32
  }
  func.func @transform_2(%arg0: i32) -> (i32, i32) {
    %c0_i32 = arith.constant 0 : i32
    %c0_i32_0 = arith.constant 0 : i32
    %c0_i32_1 = arith.constant 0 : i32
    return %c0_i32, %c0_i32_0 : i32, i32
  }
  func.func @transform_3(%arg0: i32) -> (i32, i32) {
    %c0_i32 = arith.constant 0 : i32
    %c0_i32_0 = arith.constant 0 : i32
    %c0_i32_1 = arith.constant 0 : i32
    return %c0_i32, %c0_i32_0 : i32, i32
  }
  func.func @transform_4(%arg0: i32) -> (i32, i32) {
    %c0_i32 = arith.constant 0 : i32
    %c0_i32_0 = arith.constant 0 : i32
    %c0_i32_1 = arith.constant 0 : i32
    return %c0_i32, %c0_i32_0 : i32, i32
  }
  func.func @transform_5(%arg0: i32) -> (i32, i32, i32) {
    %c0_i32 = arith.constant 0 : i32
    %c0_i32_0 = arith.constant 0 : i32
    %c0_i32_1 = arith.constant 0 : i32
    return %arg0, %c0_i32, %c0_i32_0 : i32, i32, i32
  }
}

module attributes {stable_mosaic.version = 11 : i64} {
  func.func @_fft2_real_kernel(%arg0: i32, %arg1: memref<1x8x32xf32, #tpu.memory_space<vmem>>, %arg2: memref<32x32xf32, #tpu.memory_space<vmem>>, %arg3: memref<32x32xf32, #tpu.memory_space<vmem>>, %arg4: memref<8x8xf32, #tpu.memory_space<vmem>>, %arg5: memref<8x8xf32, #tpu.memory_space<vmem>>, %arg6: memref<1x8x32xf32, #tpu.memory_space<vmem>>) attributes {dimension_semantics = [#tpu.dimension_semantics<parallel>], iteration_bounds = array<i64: 2>, scalar_prefetch = 0 : i64, scratch_operands = 0 : i64, tpu.core_type = #tpu.core_type<tc>, window_params = [{transform_indices = @transform_0, window_bounds = array<i64: 1, 8, 32>}, {pipeline_mode = #tpu.pipeline_mode<synchronous>, transform_indices = @transform_1, window_bounds = array<i64: 32, 32>}, {pipeline_mode = #tpu.pipeline_mode<synchronous>, transform_indices = @transform_2, window_bounds = array<i64: 32, 32>}, {pipeline_mode = #tpu.pipeline_mode<synchronous>, transform_indices = @transform_3, window_bounds = array<i64: 8, 8>}, {pipeline_mode = #tpu.pipeline_mode<synchronous>, transform_indices = @transform_4, window_bounds = array<i64: 8, 8>}, {transform_indices = @transform_5, window_bounds = array<i64: 1, 8, 32>}]} {
    %c0 = arith.constant 0 : index
    %c0_0 = arith.constant 0 : index
    %0 = vector.load %arg2[%c0, %c0_0] : memref<32x32xf32, #tpu.memory_space<vmem>>, vector<32x32xf32>
    %c0_1 = arith.constant 0 : index
    %c0_2 = arith.constant 0 : index
    %1 = vector.load %arg3[%c0_1, %c0_2] : memref<32x32xf32, #tpu.memory_space<vmem>>, vector<32x32xf32>
    %c0_3 = arith.constant 0 : index
    %c0_4 = arith.constant 0 : index
    %2 = vector.load %arg4[%c0_3, %c0_4] : memref<8x8xf32, #tpu.memory_space<vmem>>, vector<8x8xf32>
    %c0_5 = arith.constant 0 : index
    %c0_6 = arith.constant 0 : index
    %3 = vector.load %arg5[%c0_5, %c0_6] : memref<8x8xf32, #tpu.memory_space<vmem>>, vector<8x8xf32>
    %c0_7 = arith.constant 0 : index
    %c0_8 = arith.constant 0 : index
    %c0_9 = arith.constant 0 : index
    %4 = vector.load %arg1[%c0_7, %c0_8, %c0_9] : memref<1x8x32xf32, #tpu.memory_space<vmem>>, vector<1x8x32xf32>
    %5 = vector.shape_cast %4 : vector<1x8x32xf32> to vector<8x32xf32>
    %cst = arith.constant dense<0.000000e+00> : vector<8x32xf32>
    %6 = tpu.matmul %5, %0, %cst {dimension_numbers = #tpu.dot_dimension_numbers<[1], [0], [0], [1], [0, 0, 1, 1], [], []>} : vector<8x32xf32>, vector<32x32xf32>, vector<8x32xf32> -> vector<8x32xf32>
    %cst_10 = arith.constant dense<0.000000e+00> : vector<8x32xf32>
    %7 = tpu.matmul %5, %1, %cst_10 {dimension_numbers = #tpu.dot_dimension_numbers<[1], [0], [0], [1], [0, 0, 1, 1], [], []>} : vector<8x32xf32>, vector<32x32xf32>, vector<8x32xf32> -> vector<8x32xf32>
    %cst_11 = arith.constant dense<0.000000e+00> : vector<8x32xf32>
    %8 = tpu.matmul %2, %6, %cst_11 {dimension_numbers = #tpu.dot_dimension_numbers<[1], [0], [0], [1], [0, 0, 1, 1], [], []>} : vector<8x8xf32>, vector<8x32xf32>, vector<8x32xf32> -> vector<8x32xf32>
    %cst_12 = arith.constant dense<0.000000e+00> : vector<8x32xf32>
    %9 = tpu.matmul %3, %7, %cst_12 {dimension_numbers = #tpu.dot_dimension_numbers<[1], [0], [0], [1], [0, 0, 1, 1], [], []>} : vector<8x8xf32>, vector<8x32xf32>, vector<8x32xf32> -> vector<8x32xf32>
    %10 = arith.addf %8, %9 : vector<8x32xf32>
    %c0_13 = arith.constant 0 : index
    %c0_14 = arith.constant 0 : index
    %c0_15 = arith.constant 0 : index
    %11 = vector.load %arg6[%c0_13, %c0_14, %c0_15] : memref<1x8x32xf32, #tpu.memory_space<vmem>>, vector<1x8x32xf32>
    %12 = vector.shape_cast %11 : vector<1x8x32xf32> to vector<8x32xf32>
    %13 = vector.shape_cast %10 : vector<8x32xf32> to vector<1x8x32xf32>
    tpu.vector_store %arg6[%c0_13, %c0_14, %c0_15], %13 {strides = array<i32>} : memref<1x8x32xf32, #tpu.memory_space<vmem>>, vector<1x8x32xf32>,
    return
  }
  func.func @transform_0(%arg0: i32) -> (i32, i32, i32) {
    %c0_i32 = arith.constant 0 : i32
    %c0_i32_0 = arith.constant 0 : i32
    %c0_i32_1 = arith.constant 0 : i32
    return %arg0, %c0_i32, %c0_i32_0 : i32, i32, i32
  }
  func.func @transform_1(%arg0: i32) -> (i32, i32) {
    %c0_i32 = arith.constant 0 : i32
    %c0_i32_0 = arith.constant 0 : i32
    %c0_i32_1 = arith.constant 0 : i32
    return %c0_i32, %c0_i32_0 : i32, i32
  }
  func.func @transform_2(%arg0: i32) -> (i32, i32) {
    %c0_i32 = arith.constant 0 : i32
    %c0_i32_0 = arith.constant 0 : i32
    %c0_i32_1 = arith.constant 0 : i32
    return %c0_i32, %c0_i32_0 : i32, i32
  }
  func.func @transform_3(%arg0: i32) -> (i32, i32) {
    %c0_i32 = arith.constant 0 : i32
    %c0_i32_0 = arith.constant 0 : i32
    %c0_i32_1 = arith.constant 0 : i32
    return %c0_i32, %c0_i32_0 : i32, i32
  }
  func.func @transform_4(%arg0: i32) -> (i32, i32) {
    %c0_i32 = arith.constant 0 : i32
    %c0_i32_0 = arith.constant 0 : i32
    %c0_i32_1 = arith.constant 0 : i32
    return %c0_i32, %c0_i32_0 : i32, i32
  }
  func.func @transform_5(%arg0: i32) -> (i32, i32, i32) {
    %c0_i32 = arith.constant 0 : i32
    %c0_i32_0 = arith.constant 0 : i32
    %c0_i32_1 = arith.constant 0 : i32
    return %arg0, %c0_i32, %c0_i32_0 : i32, i32, i32
  }
}

</mosaic_0001>

<llo_original>
// kernel: tpu_custom_call.1
$region0: #{tpu_custom_call.1}
  #allocation0 [shape = 'u32[]', space=smem, size = 0x4, offset = 0x4, fixed_abs, tag = 'smem constant byte address 0x4 - core index']
  #allocation1 [shape = 'u32[144,128]{1,0:T(1,128)}', space=vmem, size = 0x12000, scoped, tag = 'internal scratch']
  %s0 = inlined_call_operand.hbm [shape: f32[2,8,32], index: 0, kind: input, shape index: {}]
  %s1 = inlined_call_operand.hbm [shape: f32[32,32], index: 1, kind: input, shape index: {}]
  %s2 = inlined_call_operand.hbm [shape: f32[32,32], index: 2, kind: input, shape index: {}]
  %s3 = inlined_call_operand.hbm [shape: f32[8,8], index: 3, kind: input, shape index: {}]
  %s4 = inlined_call_operand.hbm [shape: f32[8,8], index: 4, kind: input, shape index: {}]
  %s5 = inlined_call_operand.hbm [shape: f32[2,8,32], index: 5, kind: output, shape index: {}]
  %s6 = sld [smem:[#allocation0]]
  $region73: #{tpu_custom_call.1} parent=0
    _
  %s8 = ssub.s32 1, %s6
  %s9 = scalar_select 0, %s8, %s6
  $region1: #{tpu_custom_call.1} parent=0
    #allocation2 [shape = 'u8[8192]{0}', space=vmem, size = 0x2000, scoped, tag = 'input window, operand 0']
    #allocation3 [shape = 's32[2]{0}', space=sflag, size = 0x8, scoped, tag = 'scoped memory for tpu_custom_call.1']
    #allocation4 [shape = 's32[2]{0}', space=sflag, size = 0x8, scoped, tag = 'scoped memory for tpu_custom_call.1']
    #allocation5 [shape = 'u8[16384]{0}', space=vmem, size = 0x4000, scoped, tag = 'input window, operand 1, single buffered']
    #allocation6 [shape = 's32[1]{0}', space=sflag, size = 0x4, scoped, tag = 'scoped memory for tpu_custom_call.1']
    #allocation7 [shape = 'u8[16384]{0}', space=vmem, size = 0x4000, scoped, tag = 'input window, operand 2, single buffered']
    #allocation8 [shape = 'u8[4096]{0}', space=vmem, size = 0x1000, scoped, tag = 'input window, operand 3, single buffered']
    #allocation9 [shape = 's32[1]{0}', space=sflag, size = 0x4, scoped, tag = 'scoped memory for tpu_custom_call.1']
    #allocation10 [shape = 'u8[4096]{0}', space=vmem, size = 0x1000, scoped, tag = 'input window, operand 4, single buffered']
    #allocation11 [shape = 'u8[8192]{0}', space=vmem, size = 0x2000, scoped, tag = 'output window, operand 0']
    %10 = vsyncpa [#allocation3], 0
    %s11 = scalar_lea.sflag [#allocation3], 1
    %12 = vsyncpa %s11, 0
    %13 = vsyncpa [#allocation6], 0
    %14 = vsyncpa [#allocation9], 0
    %15 = vsyncpa [#allocation4], 0
    %s16 = scalar_lea.sflag [#allocation4], 1
    %17 = vsyncpa %s16, 0
    loop: start=0, step=1, limit=4
    $region2: #{tpu_custom_call.1} parent=1 // loop_pre_header
      _
    $region3: #{tpu_custom_call.1} parent=1 // loop_header
      %s19 = sphi 0, %s23
      %p20 = scmp.ge.s32.totalorder %s19, 4
      %s29 = sphi 0, %s31
      %s32 = sphi 0, %s29
      %s33 = sphi 0, %s32
      %s49 = sphi 0, %s33
      %s53 = sphi 0, %s53
      %s55 = sphi 0, %s53
      %s56 = sphi 0, %s55
      %s70 = sphi 0, %s56
      %s74 = sphi 0, %s74
      %s76 = sphi 0, %s74
      %s77 = sphi 0, %s76
      %s91 = sphi 0, %s77
      %s95 = sphi 0, %s95
      %s97 = sphi 0, %s95
      %s98 = sphi 0, %s97
      %s112 = sphi 0, %s98
      %s116 = sphi 0, %s116
      %s118 = sphi 0, %s116
      %s119 = sphi 0, %s118
      %s133 = sphi 0, %s119
      %s139 = sphi 0, %s141
      %s142 = sphi 0, %s139
      %s143 = sphi 0, %s142
      %s159 = sphi 0, %s143
    $region4: #{tpu_custom_call.1} parent=1 // loop_header_branch
      %22 = sbr.rel (%p20) target = $region8
    $region5: #{tpu_custom_call.1} parent=1 // loop_body
      %s24 = ssub.s32 %s19, 1
      %s25 = ssub.s32 %s19, 2
      %s26 = sadd.s32 %s19, 1
      %s27 = ssub.s32 %s19, %s26
      %p28 = scmp.eq.s32.totalorder %s27, 0
      %s30 = sadd.s32 %s29, 1
      %s31 = scalar_select %p28, %s29, %s30
      %p34 = pneg %p28
      %p35 = scmp.eq.s32.totalorder %s19, 1
      %p36 = por %p34, %p35
      %p37 = scmp.ne.s32.totalorder %s29, %s32
      %p38 = scmp.eq.s32.totalorder %s19, 0
      %p39 = por %p37, %p38
      %p40 = scmp.ne.s32.totalorder %s29, %s32
      %p41 = scmp.eq.s32.totalorder %s24, 1
      %p42 = por %p40, %p41
      %p43 = scmp.ne.s32.totalorder %s32, %s33
      %p44 = scmp.eq.s32.totalorder %s24, 0
      %p45 = por %p43, %p44
      %p46 = scmp.ne.s32.totalorder %s32, %s33
      %p47 = scmp.eq.s32.totalorder %s25, 1
      %p48 = por %p46, %p47
      %p50 = scmp.ne.s32.totalorder %s33, %s49
      %p51 = scmp.eq.s32.totalorder %s25, 0
      %p52 = por %p50, %p51
      %s54 = sadd.s32 %s53, 1
      %p57 = scmp.eq.s32.totalorder %s19, 1
      %p58 = scmp.ne.s32.totalorder %s53, %s55
      %p59 = scmp.eq.s32.totalorder %s19, 0
      %p60 = por %p58, %p59
      %p61 = scmp.ne.s32.totalorder %s53, %s55
      %p62 = scmp.eq.s32.totalorder %s24, 1
      %p63 = por %p61, %p62
      %p64 = scmp.ne.s32.totalorder %s55, %s56
      %p65 = scmp.eq.s32.totalorder %s24, 0
      %p66 = por %p64, %p65
      %p67 = scmp.ne.s32.totalorder %s55, %s56
      %p68 = scmp.eq.s32.totalorder %s25, 1
      %p69 = por %p67, %p68
      %p71 = scmp.ne.s32.totalorder %s56, %s70
      %p72 = scmp.eq.s32.totalorder %s25, 0
      %p73 = por %p71, %p72
      %s75 = sadd.s32 %s74, 1
      %p78 = scmp.eq.s32.totalorder %s19, 1
      %p79 = scmp.ne.s32.totalorder %s74, %s76
      %p80 = scmp.eq.s32.totalorder %s19, 0
      %p81 = por %p79, %p80
      %p82 = scmp.ne.s32.totalorder %s74, %s76
      %p83 = scmp.eq.s32.totalorder %s24, 1
      %p84 = por %p82, %p83
      %p85 = scmp.ne.s32.totalorder %s76, %s77
      %p86 = scmp.eq.s32.totalorder %s24, 0
      %p87 = por %p85, %p86
      %p88 = scmp.ne.s32.totalorder %s76, %s77
      %p89 = scmp.eq.s32.totalorder %s25, 1
      %p90 = por %p88, %p89
      %p92 = scmp.ne.s32.totalorder %s77, %s91
      %p93 = scmp.eq.s32.totalorder %s25, 0
      %p94 = por %p92, %p93
      %s96 = sadd.s32 %s95, 1
      %p99 = scmp.eq.s32.totalorder %s19, 1
      %p100 = scmp.ne.s32.totalorder %s95, %s97
      %p101 = scmp.eq.s32.totalorder %s19, 0
      %p102 = por %p100, %p101
      %p103 = scmp.ne.s32.totalorder %s95, %s97
      %p104 = scmp.eq.s32.totalorder %s24, 1
      %p105 = por %p103, %p104
      %p106 = scmp.ne.s32.totalorder %s97, %s98
      %p107 = scmp.eq.s32.totalorder %s24, 0
      %p108 = por %p106, %p107
      %p109 = scmp.ne.s32.totalorder %s97, %s98
      %p110 = scmp.eq.s32.totalorder %s25, 1
      %p111 = por %p109, %p110
      %p113 = scmp.ne.s32.totalorder %s98, %s112
      %p114 = scmp.eq.s32.totalorder %s25, 0
      %p115 = por %p113, %p114
      %s117 = sadd.s32 %s116, 1
      %p120 = scmp.eq.s32.totalorder %s19, 1
      %p121 = scmp.ne.s32.totalorder %s116, %s118
      %p122 = scmp.eq.s32.totalorder %s19, 0
      %p123 = por %p121, %p122
      %p124 = scmp.ne.s32.totalorder %s116, %s118
      %p125 = scmp.eq.s32.totalorder %s24, 1
      %p126 = por %p124, %p125
      %p127 = scmp.ne.s32.totalorder %s118, %s119
      %p128 = scmp.eq.s32.totalorder %s24, 0
      %p129 = por %p127, %p128
      %p130 = scmp.ne.s32.totalorder %s118, %s119
      %p131 = scmp.eq.s32.totalorder %s25, 1
      %p132 = por %p130, %p131
      %p134 = scmp.ne.s32.totalorder %s119, %s133
      %p135 = scmp.eq.s32.totalorder %s25, 0
      %p136 = por %p134, %p135
      %s137 = ssub.s32 %s19, %s26
      %p138 = scmp.eq.s32.totalorder %s137, 0
      %s140 = sadd.s32 %s139, 1
      %s141 = scalar_select %p138, %s139, %s140
      %p144 = pneg %p138
      %p145 = scmp.eq.s32.totalorder %s19, 1
      %p146 = por %p144, %p145
      %p147 = scmp.ne.s32.totalorder %s139, %s142
      %p148 = scmp.eq.s32.totalorder %s19, 0
      %p149 = por %p147, %p148
      %p150 = scmp.ne.s32.totalorder %s139, %s142
      %p151 = scmp.eq.s32.totalorder %s24, 1
      %p152 = por %p150, %p151
      %p153 = scmp.ne.s32.totalorder %s142, %s143
      %p154 = scmp.eq.s32.totalorder %s24, 0
      %p155 = por %p153, %p154
      %p156 = scmp.ne.s32.totalorder %s142, %s143
      %p157 = scmp.eq.s32.totalorder %s25, 1
      %p158 = por %p156, %p157
      %p160 = scmp.ne.s32.totalorder %s143, %s159
      %p161 = scmp.eq.s32.totalorder %s25, 0
      %p162 = por %p160, %p161
      %p163 = scmp.le.s32.totalorder 1, %s19
      %p164 = scmp.lt.s32.totalorder %s19, 3
      %p165 = pnand %p163, %p164
      %p166 = pneg %p165
      // Predicated region
      $region9: #{tpu_custom_call.1} parent=5 // pred_check
        _
      $region10: #{tpu_custom_call.1} parent=5 // pred_check_branch
        %168 = sbr.rel (%p165) target = $region12
      $region11: #{tpu_custom_call.1} parent=5 // pred_region
        %s169 = ssub.s32 %s19, 1
        // Predicated region
        $region13: #{tpu_custom_call.1} parent=11 // pred_check
          %p170 = pneg %p66
        $region14: #{tpu_custom_call.1} parent=11 // pred_check_branch
          %172 = sbr.rel (%p170) target = $region16
        $region15: #{tpu_custom_call.1} parent=11 // pred_region
          %s174 = ssub.s32 512, 512
          %175 = vsyncadd [#allocation6], %s174
          %s176 = sshll.u32 [#allocation5], 4
          %s177 = int_to_ptr.vmem [resolvable:$true] %s176
          %182 = dma.hbm_to_vmem [thread:$0]  %s1, 512, %s177, [#allocation6], 128, 128, 8
        $region16: #{tpu_custom_call.1} parent=11 // pred_fallthru
          _
        // Predicated region
        $region17: #{tpu_custom_call.1} parent=11 // pred_check
          %p183 = pneg %p87
        $region18: #{tpu_custom_call.1} parent=11 // pred_check_branch
          %185 = sbr.rel (%p183) target = $region20
        $region19: #{tpu_custom_call.1} parent=11 // pred_region
          %s187 = ssub.s32 512, 512
          %188 = vsyncadd [#allocation6], %s187
          %s189 = sshll.u32 [#allocation7], 4
          %s190 = int_to_ptr.vmem [resolvable:$true] %s189
          %195 = dma.hbm_to_vmem [thread:$0]  %s2, 512, %s190, [#allocation6], 128, 128, 8
        $region20: #{tpu_custom_call.1} parent=11 // pred_fallthru
          _
        // Predicated region
        $region21: #{tpu_custom_call.1} parent=11 // pred_check
          %p196 = pneg %p108
        $region22: #{tpu_custom_call.1} parent=11 // pred_check_branch
          %198 = sbr.rel (%p196) target = $region24
        $region23: #{tpu_custom_call.1} parent=11 // pred_region
          %s200 = ssub.s32 128, 128
          %201 = vsyncadd [#allocation9], %s200
          %s203 = sshll.u32 [#allocation8], 4
          %s204 = int_to_ptr.vmem [resolvable:$true] %s203
          %206 = dma.hbm_to_vmem [thread:$0]  %s3, 128, %s204, [#allocation9]
        $region24: #{tpu_custom_call.1} parent=11 // pred_fallthru
          _
        // Predicated region
        $region25: #{tpu_custom_call.1} parent=11 // pred_check
          %p207 = pneg %p129
        $region26: #{tpu_custom_call.1} parent=11 // pred_check_branch
          %209 = sbr.rel (%p207) target = $region28
        $region27: #{tpu_custom_call.1} parent=11 // pred_region
          %s211 = ssub.s32 128, 128
          %212 = vsyncadd [#allocation9], %s211
          %s214 = sshll.u32 [#allocation10], 4
          %s215 = int_to_ptr.vmem [resolvable:$true] %s214
          %217 = dma.hbm_to_vmem [thread:$0]  %s4, 128, %s215, [#allocation9]
        $region28: #{tpu_custom_call.1} parent=11 // pred_fallthru
          _
      $region12: #{tpu_custom_call.1} parent=5 // pred_fallthru
        _
      %p218 = scmp.lt.s32.totalorder %s19, 2
      // Predicated region
      $region29: #{tpu_custom_call.1} parent=5 // pred_check
        %p219 = pneg %p218
      $region30: #{tpu_custom_call.1} parent=5 // pred_check_branch
        %221 = sbr.rel (%p219) target = $region32
      $region31: #{tpu_custom_call.1} parent=5 // pred_region
        // Predicated region
        $region33: #{tpu_custom_call.1} parent=31 // pred_check
          %p222 = pneg %p39
        $region34: #{tpu_custom_call.1} parent=31 // pred_check_branch
          %224 = sbr.rel (%p222) target = $region36
        $region35: #{tpu_custom_call.1} parent=31 // pred_region
          %s225 = sand.u32 %s29, 1
          %s226 = scalar_lea.sflag [#allocation3], %s225
          %s227 = sand.u32 %s29, 1
          %s228 = smul.addr %s227, 8
          %s229 = scalar_lea.vmem [#allocation2], %s228
          %s231 = ssub.s32 128, 128
          %232 = vsyncadd %s226, %s231
          %s233 = smul.addr %s19, 128
          %s234 = scalar_lea.hbm %s0, %s233
          %s236 = sshll.u32 %s229, 4
          %s237 = int_to_ptr.vmem [resolvable:$true] %s236
          %239 = dma.hbm_to_vmem [thread:$0]  %s234, 128, %s237, %s226
        $region36: #{tpu_custom_call.1} parent=31 // pred_fallthru
          _
      $region32: #{tpu_custom_call.1} parent=5 // pred_fallthru
        _
      %p240 = scmp.le.s32.totalorder 1, %s19
      %p241 = scmp.lt.s32.totalorder %s19, 3
      %p242 = pnand %p240, %p241
      %p243 = pneg %p242
      // Predicated region
      $region37: #{tpu_custom_call.1} parent=5 // pred_check
        _
      $region38: #{tpu_custom_call.1} parent=5 // pred_check_branch
        %245 = sbr.rel (%p242) target = $region40
      $region39: #{tpu_custom_call.1} parent=5 // pred_region
        %s246 = ssub.s32 %s19, 1
        %s247 = sand.u32 %s32, 1
        %s248 = scalar_lea.sflag [#allocation3], %s247
        %s249 = sand.u32 %s32, 1
        %s250 = smul.addr %s249, 8
        %s251 = scalar_lea.vmem [#allocation2], %s250
        // Predicated region
        $region41: #{tpu_custom_call.1} parent=39 // pred_check
          %p252 = pneg %p45
        $region42: #{tpu_custom_call.1} parent=39 // pred_check_branch
          %254 = sbr.rel (%p252) target = $region44
        $region43: #{tpu_custom_call.1} parent=39 // pred_region
          %255 = dma.done %s248, 128
        $region44: #{tpu_custom_call.1} parent=39 // pred_fallthru
          _
        // Predicated region
        $region45: #{tpu_custom_call.1} parent=39 // pred_check
          %p256 = pneg %p66
        $region46: #{tpu_custom_call.1} parent=39 // pred_check_branch
          %258 = sbr.rel (%p256) target = $region48
        $region47: #{tpu_custom_call.1} parent=39 // pred_region
          %259 = dma.done [#allocation6], 512
        $region48: #{tpu_custom_call.1} parent=39 // pred_fallthru
          _
        // Predicated region
        $region49: #{tpu_custom_call.1} parent=39 // pred_check
          %p260 = pneg %p87
        $region50: #{tpu_custom_call.1} parent=39 // pred_check_branch
          %262 = sbr.rel (%p260) target = $region52
        $region51: #{tpu_custom_call.1} parent=39 // pred_region
          %263 = dma.done [#allocation6], 512
        $region52: #{tpu_custom_call.1} parent=39 // pred_fallthru
          _
        // Predicated region
        $region53: #{tpu_custom_call.1} parent=39 // pred_check
          %p264 = pneg %p108
        $region54: #{tpu_custom_call.1} parent=39 // pred_check_branch
          %266 = sbr.rel (%p264) target = $region56
        $region55: #{tpu_custom_call.1} parent=39 // pred_region
          %267 = dma.done [#allocation9], 128
        $region56: #{tpu_custom_call.1} parent=39 // pred_fallthru
          _
        // Predicated region
        $region57: #{tpu_custom_call.1} parent=39 // pred_check
          %p268 = pneg %p129
        $region58: #{tpu_custom_call.1} parent=39 // pred_check_branch
          %270 = sbr.rel (%p268) target = $region60
        $region59: #{tpu_custom_call.1} parent=39 // pred_region
          %271 = dma.done [#allocation9], 128
        $region60: #{tpu_custom_call.1} parent=39 // pred_fallthru
          _
        %s272 = sand.u32 %s32, 1
        %s273 = scalar_lea.sflag [#allocation3], %s272
        %s274 = sand.u32 %s32, 1
        %s275 = smul.addr %s274, 8
        %s276 = scalar_lea.vmem [#allocation2], %s275
        %p277 = pneg %p45
        %p278 = pneg %p42
        %p279 = pneg %p66
        %p280 = pneg %p63
        %p281 = pneg %p87
        %p282 = pneg %p84
        %p283 = pneg %p108
        %p284 = pneg %p105
        %p285 = pneg %p129
        %p286 = pneg %p126
        %p287 = pneg %p155
        %p288 = pneg %p152
        %s289 = sand.u32 %s142, 1
        %s290 = scalar_lea.sflag [#allocation4], %s289
        %s291 = sand.u32 %s142, 1
        %s292 = smul.addr %s291, 8
        %s293 = scalar_lea.vmem [#allocation11], %s292
        %v294 = vld [vmem:[#allocation5] sm:$0xff]
        %v295 = vld [vmem:[#allocation5 + $0x8] sm:$0xff]
        %v296 = vld [vmem:[#allocation5 + $0x10] sm:$0xff]
        %v297 = vld [vmem:[#allocation5 + $0x18] sm:$0xff]
        %v298 = vld [vmem:[#allocation7] sm:$0xff]
        %v299 = vld [vmem:[#allocation7 + $0x8] sm:$0xff]
        %v300 = vld [vmem:[#allocation7 + $0x10] sm:$0xff]
        %v301 = vld [vmem:[#allocation7 + $0x18] sm:$0xff]
        %v302 = vld [vmem:[#allocation8] sm:$0xff]
        %v303 = vld [vmem:[#allocation10] sm:$0xff]
        %v304 = vld [vmem:[%s251] sm:$0xff]
        %vm305 = vcmask 261120
        %v307 = vsel %vm305, %v304, 0
        %309 = vmatprep.subr.mxu0 0.0
        %310 = vmatpush1.msra.mxu0 %v294
        %311 = vmatprep.subr.mxu0 0.0
        %312 = vmatpush1.msra.mxu0 %v295
        %313 = vmatprep.subr.mxu0 0.0
        %314 = vmatpush1.msra.mxu0 %v296
        %315 = vmatprep.subr.mxu0 0.0
        %316 = vmatpush1.msra.mxu0 %v297
        %317 = vmatprep.subr.mxu0 0.0
        %318 = vmatpush1.msra.mxu0 0.0
        %319 = vmatprep.subr.mxu0 0.0
        %320 = vmatpush1.msra.mxu0 0.0
        %321 = vmatprep.subr.mxu0 0.0
        %322 = vmatpush1.msra.mxu0 0.0
        %323 = vmatprep.subr.mxu0 0.0
        %324 = vmatpush1.msra.mxu0 0.0
        %325 = vmatprep.subr.mxu0 0.0
        %326 = vmatpush1.msra.mxu0 0.0
        %327 = vmatprep.subr.mxu0 0.0
        %328 = vmatpush1.msra.mxu0 0.0
        %329 = vmatprep.subr.mxu0 0.0
        %330 = vmatpush1.msra.mxu0 0.0
        %331 = vmatprep.subr.mxu0 0.0
        %332 = vmatpush1.msra.mxu0 0.0
        %333 = vmatprep.subr.mxu0 0.0
        %334 = vmatpush1.msra.mxu0 0.0
        %335 = vmatprep.subr.mxu0 0.0
        %336 = vmatpush1.msra.mxu0 0.0
        %337 = vmatprep.subr.mxu0 0.0
        %338 = vmatpush1.msra.mxu0 0.0
        %339 = vmatprep.subr.mxu0 0.0
        %340 = vmatpush1.msra.mxu0 0.0
        %341 = vmatprep.subr.mxu0 0.0
        %342 = vmatpush1.msra.mxu0 0.0
        %343 = vmatprep.subr.mxu0 0.0
        %344 = vmatpush1.msra.mxu0 0.0
        %345 = vmatprep.subr.mxu0 0.0
        %346 = vmatpush1.msra.mxu0 0.0
        %347 = vmatprep.subr.mxu0 0.0
        %348 = vmatpush1.msra.mxu0 0.0
        %349 = vmatprep.subr.mxu0 0.0
        %350 = vmatpush1.msra.mxu0 0.0
        %351 = vmatprep.subr.mxu0 0.0
        %352 = vmatpush1.msra.mxu0 0.0
        %353 = vmatprep.subr.mxu0 0.0
        %354 = vmatpush1.msra.mxu0 0.0
        %355 = vmatprep.subr.mxu0 0.0
        %356 = vmatpush1.msra.mxu0 0.0
        %357 = vmatprep.subr.mxu0 0.0
        %358 = vmatpush1.msra.mxu0 0.0
        %359 = vmatprep.subr.mxu0 0.0
        %360 = vmatpush1.msra.mxu0 0.0
        %361 = vmatprep.subr.mxu0 0.0
        %362 = vmatpush1.msra.mxu0 0.0
        %363 = vmatprep.subr.mxu0 0.0
        %364 = vmatpush1.msra.mxu0 0.0
        %365 = vmatprep.subr.mxu0 0.0
        %366 = vmatpush1.msra.mxu0 0.0
        %367 = vmatprep.subr.mxu0 0.0
        %368 = vmatpush1.msra.mxu0 0.0
        %369 = vmatprep.subr.mxu0 0.0
        %370 = vmatpush1.msra.mxu0 0.0
        %371 = vmatprep.subr.mxu0 0.0
        %372 = vmatpush1.msra.mxu0 0.0
        %373 = vmatprep.mubr.f32.mxu0 0.0
        %374 = vmatmul.mubr.f32.gmra.mrb[0].mxu0 %v307
        %v375 = vpop.f32.mrb[0].mxu0
        %v376 = vadd.f32 0.0, %v375
        %v377 = vpop.f32.mrb[0].mxu0
        %378 = vdwg.mxu0
        %379 = vmatprep.subr.mxu0 0.0
        %380 = vmatpush1.msra.mxu0 %v298
        %381 = vmatprep.subr.mxu0 0.0
        %382 = vmatpush1.msra.mxu0 %v299
        %383 = vmatprep.subr.mxu0 0.0
        %384 = vmatpush1.msra.mxu0 %v300
        %385 = vmatprep.subr.mxu0 0.0
        %386 = vmatpush1.msra.mxu0 %v301
        %387 = vmatprep.subr.mxu0 0.0
        %388 = vmatpush1.msra.mxu0 0.0
        %389 = vmatprep.subr.mxu0 0.0
        %390 = vmatpush1.msra.mxu0 0.0
        %391 = vmatprep.subr.mxu0 0.0
        %392 = vmatpush1.msra.mxu0 0.0
        %393 = vmatprep.subr.mxu0 0.0
        %394 = vmatpush1.msra.mxu0 0.0
        %395 = vmatprep.subr.mxu0 0.0
        %396 = vmatpush1.msra.mxu0 0.0
        %397 = vmatprep.subr.mxu0 0.0
        %398 = vmatpush1.msra.mxu0 0.0
        %399 = vmatprep.subr.mxu0 0.0
        %400 = vmatpush1.msra.mxu0 0.0
        %401 = vmatprep.subr.mxu0 0.0
        %402 = vmatpush1.msra.mxu0 0.0
        %403 = vmatprep.subr.mxu0 0.0
        %404 = vmatpush1.msra.mxu0 0.0
        %405 = vmatprep.subr.mxu0 0.0
        %406 = vmatpush1.msra.mxu0 0.0
        %407 = vmatprep.subr.mxu0 0.0
        %408 = vmatpush1.msra.mxu0 0.0
        %409 = vmatprep.subr.mxu0 0.0
        %410 = vmatpush1.msra.mxu0 0.0
        %411 = vmatprep.subr.mxu0 0.0
        %412 = vmatpush1.msra.mxu0 0.0
        %413 = vmatprep.subr.mxu0 0.0
        %414 = vmatpush1.msra.mxu0 0.0
        %415 = vmatprep.subr.mxu0 0.0
        %416 = vmatpush1.msra.mxu0 0.0
        %417 = vmatprep.subr.mxu0 0.0
        %418 = vmatpush1.msra.mxu0 0.0
        %419 = vmatprep.subr.mxu0 0.0
        %420 = vmatpush1.msra.mxu0 0.0
        %421 = vmatprep.subr.mxu0 0.0
        %422 = vmatpush1.msra.mxu0 0.0
        %423 = vmatprep.subr.mxu0 0.0
        %424 = vmatpush1.msra.mxu0 0.0
        %425 = vmatprep.subr.mxu0 0.0
        %426 = vmatpush1.msra.mxu0 0.0
        %427 = vmatprep.subr.mxu0 0.0
        %428 = vmatpush1.msra.mxu0 0.0
        %429 = vmatprep.subr.mxu0 0.0
        %430 = vmatpush1.msra.mxu0 0.0
        %431 = vmatprep.subr.mxu0 0.0
        %432 = vmatpush1.msra.mxu0 0.0
        %433 = vmatprep.subr.mxu0 0.0
        %434 = vmatpush1.msra.mxu0 0.0
        %435 = vmatprep.subr.mxu0 0.0
        %436 = vmatpush1.msra.mxu0 0.0
        %437 = vmatprep.subr.mxu0 0.0
        %438 = vmatpush1.msra.mxu0 0.0
        %439 = vmatprep.subr.mxu0 0.0
        %440 = vmatpush1.msra.mxu0 0.0
        %441 = vmatprep.subr.mxu0 0.0
        %442 = vmatpush1.msra.mxu0 0.0
        %443 = vmatprep.mubr.f32.mxu0 0.0
        %444 = vmatmul.mubr.f32.gmra.mrb[0].mxu0 %v307
        %v445 = vpop.f32.mrb[0].mxu0
        %v446 = vadd.f32 0.0, %v445
        %v447 = vpop.f32.mrb[0].mxu0
        %448 = vdwg.mxu0
        %vm449 = vcmask 64512
        %v451 = vsel %vm449, %v303, 0
        %453 = vmatprep.subr.mxu0 0.0
        %454 = vmatpush1.msra.mxu0 %v446
        %455 = vmatprep.subr.mxu0 0.0
        %456 = vmatpush1.msra.mxu0 0.0
        %457 = vmatprep.subr.mxu0 0.0
        %458 = vmatpush1.msra.mxu0 0.0
        %459 = vmatprep.subr.mxu0 0.0
        %460 = vmatpush1.msra.mxu0 0.0
        %461 = vmatprep.subr.mxu0 0.0
        %462 = vmatpush1.msra.mxu0 0.0
        %463 = vmatprep.subr.mxu0 0.0
        %464 = vmatpush1.msra.mxu0 0.0
        %465 = vmatprep.subr.mxu0 0.0
        %466 = vmatpush1.msra.mxu0 0.0
        %467 = vmatprep.subr.mxu0 0.0
        %468 = vmatpush1.msra.mxu0 0.0
        %469 = vmatprep.subr.mxu0 0.0
        %470 = vmatpush1.msra.mxu0 0.0
        %471 = vmatprep.subr.mxu0 0.0
        %472 = vmatpush1.msra.mxu0 0.0
        %473 = vmatprep.subr.mxu0 0.0
        %474 = vmatpush1.msra.mxu0 0.0
        %475 = vmatprep.subr.mxu0 0.0
        %476 = vmatpush1.msra.mxu0 0.0
        %477 = vmatprep.subr.mxu0 0.0
        %478 = vmatpush1.msra.mxu0 0.0
        %479 = vmatprep.subr.mxu0 0.0
        %480 = vmatpush1.msra.mxu0 0.0
        %481 = vmatprep.subr.mxu0 0.0
        %482 = vmatpush1.msra.mxu0 0.0
        %483 = vmatprep.subr.mxu0 0.0
        %484 = vmatpush1.msra.mxu0 0.0
        %485 = vmatprep.subr.mxu0 0.0
        %486 = vmatpush1.msra.mxu0 0.0
        %487 = vmatprep.subr.mxu0 0.0
        %488 = vmatpush1.msra.mxu0 0.0
        %489 = vmatprep.subr.mxu0 0.0
        %490 = vmatpush1.msra.mxu0 0.0
        %491 = vmatprep.subr.mxu0 0.0
        %492 = vmatpush1.msra.mxu0 0.0
        %493 = vmatprep.subr.mxu0 0.0
        %494 = vmatpush1.msra.mxu0 0.0
        %495 = vmatprep.subr.mxu0 0.0
        %496 = vmatpush1.msra.mxu0 0.0
        %497 = vmatprep.subr.mxu0 0.0
        %498 = vmatpush1.msra.mxu0 0.0
        %499 = vmatprep.subr.mxu0 0.0
        %500 = vmatpush1.msra.mxu0 0.0
        %501 = vmatprep.subr.mxu0 0.0
        %502 = vmatpush1.msra.mxu0 0.0
        %503 = vmatprep.subr.mxu0 0.0
        %504 = vmatpush1.msra.mxu0 0.0
        %505 = vmatprep.subr.mxu0 0.0
        %506 = vmatpush1.msra.mxu0 0.0
        %507 = vmatprep.subr.mxu0 0.0
        %508 = vmatpush1.msra.mxu0 0.0
        %509 = vmatprep.subr.mxu0 0.0
        %510 = vmatpush1.msra.mxu0 0.0
        %511 = vmatprep.subr.mxu0 0.0
        %512 = vmatpush1.msra.mxu0 0.0
        %513 = vmatprep.subr.mxu0 0.0
        %514 = vmatpush1.msra.mxu0 0.0
        %515 = vmatprep.subr.mxu0 0.0
        %516 = vmatpush1.msra.mxu0 0.0
        %517 = vmatprep.mubr.f32.mxu0 0.0
        %518 = vmatmul.mubr.f32.gmra.mrb[0].mxu0 %v451
        %v519 = vpop.f32.mrb[0].mxu0
        %v520 = vadd.f32 0.0, %v519
        %v521 = vpop.f32.mrb[0].mxu0
        %522 = vdwg.mxu0
        %v524 = vsel %vm449, %v302, 0
        %526 = vmatprep.subr.mxu0 0.0
        %527 = vmatpush1.msra.mxu0 %v376
        %528 = vmatprep.subr.mxu0 0.0
        %529 = vmatpush1.msra.mxu0 0.0
        %530 = vmatprep.subr.mxu0 0.0
        %531 = vmatpush1.msra.mxu0 0.0
        %532 = vmatprep.subr.mxu0 0.0
        %533 = vmatpush1.msra.mxu0 0.0
        %534 = vmatprep.subr.mxu0 0.0
        %535 = vmatpush1.msra.mxu0 0.0
        %536 = vmatprep.subr.mxu0 0.0
        %537 = vmatpush1.msra.mxu0 0.0
        %538 = vmatprep.subr.mxu0 0.0
        %539 = vmatpush1.msra.mxu0 0.0
        %540 = vmatprep.subr.mxu0 0.0
        %541 = vmatpush1.msra.mxu0 0.0
        %542 = vmatprep.subr.mxu0 0.0
        %543 = vmatpush1.msra.mxu0 0.0
        %544 = vmatprep.subr.mxu0 0.0
        %545 = vmatpush1.msra.mxu0 0.0
        %546 = vmatprep.subr.mxu0 0.0
        %547 = vmatpush1.msra.mxu0 0.0
        %548 = vmatprep.subr.mxu0 0.0
        %549 = vmatpush1.msra.mxu0 0.0
        %550 = vmatprep.subr.mxu0 0.0
        %551 = vmatpush1.msra.mxu0 0.0
        %552 = vmatprep.subr.mxu0 0.0
        %553 = vmatpush1.msra.mxu0 0.0
        %554 = vmatprep.subr.mxu0 0.0
        %555 = vmatpush1.msra.mxu0 0.0
        %556 = vmatprep.subr.mxu0 0.0
        %557 = vmatpush1.msra.mxu0 0.0
        %558 = vmatprep.subr.mxu0 0.0
        %559 = vmatpush1.msra.mxu0 0.0
        %560 = vmatprep.subr.mxu0 0.0
        %561 = vmatpush1.msra.mxu0 0.0
        %562 = vmatprep.subr.mxu0 0.0
        %563 = vmatpush1.msra.mxu0 0.0
        %564 = vmatprep.subr.mxu0 0.0
        %565 = vmatpush1.msra.mxu0 0.0
        %566 = vmatprep.subr.mxu0 0.0
        %567 = vmatpush1.msra.mxu0 0.0
        %568 = vmatprep.subr.mxu0 0.0
        %569 = vmatpush1.msra.mxu0 0.0
        %570 = vmatprep.subr.mxu0 0.0
        %571 = vmatpush1.msra.mxu0 0.0
        %572 = vmatprep.subr.mxu0 0.0
        %573 = vmatpush1.msra.mxu0 0.0
        %574 = vmatprep.subr.mxu0 0.0
        %575 = vmatpush1.msra.mxu0 0.0
        %576 = vmatprep.subr.mxu0 0.0
        %577 = vmatpush1.msra.mxu0 0.0
        %578 = vmatprep.subr.mxu0 0.0
        %579 = vmatpush1.msra.mxu0 0.0
        %580 = vmatprep.subr.mxu0 0.0
        %581 = vmatpush1.msra.mxu0 0.0
        %582 = vmatprep.subr.mxu0 0.0
        %583 = vmatpush1.msra.mxu0 0.0
        %584 = vmatprep.subr.mxu0 0.0
        %585 = vmatpush1.msra.mxu0 0.0
        %586 = vmatprep.subr.mxu0 0.0
        %587 = vmatpush1.msra.mxu0 0.0
        %588 = vmatprep.subr.mxu0 0.0
        %589 = vmatpush1.msra.mxu0 0.0
        %590 = vmatprep.mubr.f32.mxu0 0.0
        %591 = vmatmul.mubr.f32.gmra.mrb[0].mxu0 %v524
        %v592 = vpop.f32.mrb[0].mxu0
        %v593 = vadd.f32 %v520, %v592
        %v594 = vpop.f32.mrb[0].mxu0
        %595 = vdwg.mxu0
        %596 = vst.msk [vmem:[%s293] sm:$0xff] %vm305, %v593
        %s597 = sand.u32 %s142, 1
        %s598 = scalar_lea.sflag [#allocation4], %s597
        %s599 = sand.u32 %s142, 1
        %s600 = smul.addr %s599, 8
        %s601 = scalar_lea.vmem [#allocation11], %s600
        // Predicated region
        $region61: #{tpu_custom_call.1} parent=39 // pred_check
          %p602 = pneg %p152
        $region62: #{tpu_custom_call.1} parent=39 // pred_check_branch
          %604 = sbr.rel (%p602) target = $region64
        $region63: #{tpu_custom_call.1} parent=39 // pred_region
          %s606 = ssub.s32 128, 128
          %607 = vsyncadd %s598, %s606
          %s608 = smul.addr %s24, 128
          %s609 = scalar_lea.hbm %s5, %s608
          %s611 = sshll.u32 %s601, 4
          %s612 = int_to_ptr.vmem [resolvable:$true] %s611
          %614 = dma.vmem_to_hbm [thread:$0]  %s612, 128, %s609, %s598
        $region64: #{tpu_custom_call.1} parent=39 // pred_fallthru
          _
      $region40: #{tpu_custom_call.1} parent=5 // pred_fallthru
        _
      %p615 = scmp.le.s32.totalorder 2, %s19
      // Predicated region
      $region65: #{tpu_custom_call.1} parent=5 // pred_check
        %p616 = pneg %p615
      $region66: #{tpu_custom_call.1} parent=5 // pred_check_branch
        %618 = sbr.rel (%p616) target = $region68
      $region67: #{tpu_custom_call.1} parent=5 // pred_region
        %s619 = ssub.s32 %s19, 2
        // Predicated region
        $region69: #{tpu_custom_call.1} parent=67 // pred_check
          %p620 = pneg %p158
        $region70: #{tpu_custom_call.1} parent=67 // pred_check_branch
          %622 = sbr.rel (%p620) target = $region72
        $region71: #{tpu_custom_call.1} parent=67 // pred_region
          %s623 = sand.u32 %s143, 1
          %s624 = scalar_lea.sflag [#allocation4], %s623
          %s625 = sand.u32 %s143, 1
          %s626 = smul.addr %s625, 8
          %s627 = scalar_lea.vmem [#allocation11], %s626
          %628 = dma.done %s624, 128
        $region72: #{tpu_custom_call.1} parent=67 // pred_fallthru
          _
      $region68: #{tpu_custom_call.1} parent=5 // pred_fallthru
        _
    $region6: #{tpu_custom_call.1} parent=1 // loop_footer
      %s23 = sadd.s32 1, %s19
    $region7: #{tpu_custom_call.1} parent=1 // loop_footer_branch
      %18 = sbr.rel target = $region3
    $region8: #{tpu_custom_call.1} parent=1 // loop_exit
      _
    %629 = vsyncpa [#allocation3], 1
    %s630 = scalar_lea.sflag [#allocation3], 1
    %631 = vsyncpa %s630, 1
    %632 = vsyncpa [#allocation6], 1
    %633 = vsyncpa [#allocation9], 1
    %634 = vsyncpa [#allocation4], 1
    %s635 = scalar_lea.sflag [#allocation4], 1
    %636 = vsyncpa %s635, 1

// kernel: tpu_custom_call.1
$region0: #{tpu_custom_call.1}
  #allocation0 [shape = 'u32[]', space=smem, size = 0x4, offset = 0x4, fixed_abs, tag = 'smem constant byte address 0x4 - core index']
  #allocation1 [shape = 'u32[144,128]{1,0:T(1,128)}', space=vmem, size = 0x12000, scoped, tag = 'internal scratch']
  %s0 = inlined_call_operand.hbm [shape: f32[2,8,32], index: 0, kind: input, shape index: {}]
  %s1 = inlined_call_operand.hbm [shape: f32[32,32], index: 1, kind: input, shape index: {}]
  %s2 = inlined_call_operand.hbm [shape: f32[32,32], index: 2, kind: input, shape index: {}]
  %s3 = inlined_call_operand.hbm [shape: f32[8,8], index: 3, kind: input, shape index: {}]
  %s4 = inlined_call_operand.hbm [shape: f32[8,8], index: 4, kind: input, shape index: {}]
  %s5 = inlined_call_operand.hbm [shape: f32[2,8,32], index: 5, kind: output, shape index: {}]
  %s6 = sld [smem:[#allocation0]]
  $region73: #{tpu_custom_call.1} parent=0
    _
  %s8 = ssub.s32 1, %s6
  %s9 = scalar_select 0, %s8, %s6
  $region1: #{tpu_custom_call.1} parent=0
    #allocation2 [shape = 'u8[8192]{0}', space=vmem, size = 0x2000, scoped, tag = 'input window, operand 0']
    #allocation3 [shape = 's32[2]{0}', space=sflag, size = 0x8, scoped, tag = 'scoped memory for tpu_custom_call.1']
    #allocation4 [shape = 's32[2]{0}', space=sflag, size = 0x8, scoped, tag = 'scoped memory for tpu_custom_call.1']
    #allocation5 [shape = 'u8[16384]{0}', space=vmem, size = 0x4000, scoped, tag = 'input window, operand 1, single buffered']
    #allocation6 [shape = 's32[1]{0}', space=sflag, size = 0x4, scoped, tag = 'scoped memory for tpu_custom_call.1']
    #allocation7 [shape = 'u8[16384]{0}', space=vmem, size = 0x4000, scoped, tag = 'input window, operand 2, single buffered']
    #allocation8 [shape = 'u8[4096]{0}', space=vmem, size = 0x1000, scoped, tag = 'input window, operand 3, single buffered']
    #allocation9 [shape = 's32[1]{0}', space=sflag, size = 0x4, scoped, tag = 'scoped memory for tpu_custom_call.1']
    #allocation10 [shape = 'u8[4096]{0}', space=vmem, size = 0x1000, scoped, tag = 'input window, operand 4, single buffered']
    #allocation11 [shape = 'u8[8192]{0}', space=vmem, size = 0x2000, scoped, tag = 'output window, operand 0']
    %10 = vsyncpa [#allocation3], 0
    %s11 = scalar_lea.sflag [#allocation3], 1
    %12 = vsyncpa %s11, 0
    %13 = vsyncpa [#allocation6], 0
    %14 = vsyncpa [#allocation9], 0
    %15 = vsyncpa [#allocation4], 0
    %s16 = scalar_lea.sflag [#allocation4], 1
    %17 = vsyncpa %s16, 0
    loop: start=0, step=1, limit=4
    $region2: #{tpu_custom_call.1} parent=1 // loop_pre_header
      _
    $region3: #{tpu_custom_call.1} parent=1 // loop_header
      %s19 = sphi 0, %s23
      %p20 = scmp.ge.s32.totalorder %s19, 4
      %s29 = sphi 0, %s31
      %s32 = sphi 0, %s29
      %s33 = sphi 0, %s32
      %s49 = sphi 0, %s33
      %s53 = sphi 0, %s53
      %s55 = sphi 0, %s53
      %s56 = sphi 0, %s55
      %s70 = sphi 0, %s56
      %s74 = sphi 0, %s74
      %s76 = sphi 0, %s74
      %s77 = sphi 0, %s76
      %s91 = sphi 0, %s77
      %s95 = sphi 0, %s95
      %s97 = sphi 0, %s95
      %s98 = sphi 0, %s97
      %s112 = sphi 0, %s98
      %s116 = sphi 0, %s116
      %s118 = sphi 0, %s116
      %s119 = sphi 0, %s118
      %s133 = sphi 0, %s119
      %s139 = sphi 0, %s141
      %s142 = sphi 0, %s139
      %s143 = sphi 0, %s142
      %s159 = sphi 0, %s143
    $region4: #{tpu_custom_call.1} parent=1 // loop_header_branch
      %22 = sbr.rel (%p20) target = $region8
    $region5: #{tpu_custom_call.1} parent=1 // loop_body
      %s24 = ssub.s32 %s19, 1
      %s25 = ssub.s32 %s19, 2
      %s26 = sadd.s32 %s19, 1
      %s27 = ssub.s32 %s19, %s26
      %p28 = scmp.eq.s32.totalorder %s27, 0
      %s30 = sadd.s32 %s29, 1
      %s31 = scalar_select %p28, %s29, %s30
      %p34 = pneg %p28
      %p35 = scmp.eq.s32.totalorder %s19, 1
      %p36 = por %p34, %p35
      %p37 = scmp.ne.s32.totalorder %s29, %s32
      %p38 = scmp.eq.s32.totalorder %s19, 0
      %p39 = por %p37, %p38
      %p40 = scmp.ne.s32.totalorder %s29, %s32
      %p41 = scmp.eq.s32.totalorder %s24, 1
      %p42 = por %p40, %p41
      %p43 = scmp.ne.s32.totalorder %s32, %s33
      %p44 = scmp.eq.s32.totalorder %s24, 0
      %p45 = por %p43, %p44
      %p46 = scmp.ne.s32.totalorder %s32, %s33
      %p47 = scmp.eq.s32.totalorder %s25, 1
      %p48 = por %p46, %p47
      %p50 = scmp.ne.s32.totalorder %s33, %s49
      %p51 = scmp.eq.s32.totalorder %s25, 0
      %p52 = por %p50, %p51
      %s54 = sadd.s32 %s53, 1
      %p57 = scmp.eq.s32.totalorder %s19, 1
      %p58 = scmp.ne.s32.totalorder %s53, %s55
      %p59 = scmp.eq.s32.totalorder %s19, 0
      %p60 = por %p58, %p59
      %p61 = scmp.ne.s32.totalorder %s53, %s55
      %p62 = scmp.eq.s32.totalorder %s24, 1
      %p63 = por %p61, %p62
      %p64 = scmp.ne.s32.totalorder %s55, %s56
      %p65 = scmp.eq.s32.totalorder %s24, 0
      %p66 = por %p64, %p65
      %p67 = scmp.ne.s32.totalorder %s55, %s56
      %p68 = scmp.eq.s32.totalorder %s25, 1
      %p69 = por %p67, %p68
      %p71 = scmp.ne.s32.totalorder %s56, %s70
      %p72 = scmp.eq.s32.totalorder %s25, 0
      %p73 = por %p71, %p72
      %s75 = sadd.s32 %s74, 1
      %p78 = scmp.eq.s32.totalorder %s19, 1
      %p79 = scmp.ne.s32.totalorder %s74, %s76
      %p80 = scmp.eq.s32.totalorder %s19, 0
      %p81 = por %p79, %p80
      %p82 = scmp.ne.s32.totalorder %s74, %s76
      %p83 = scmp.eq.s32.totalorder %s24, 1
      %p84 = por %p82, %p83
      %p85 = scmp.ne.s32.totalorder %s76, %s77
      %p86 = scmp.eq.s32.totalorder %s24, 0
      %p87 = por %p85, %p86
      %p88 = scmp.ne.s32.totalorder %s76, %s77
      %p89 = scmp.eq.s32.totalorder %s25, 1
      %p90 = por %p88, %p89
      %p92 = scmp.ne.s32.totalorder %s77, %s91
      %p93 = scmp.eq.s32.totalorder %s25, 0
      %p94 = por %p92, %p93
      %s96 = sadd.s32 %s95, 1
      %p99 = scmp.eq.s32.totalorder %s19, 1
      %p100 = scmp.ne.s32.totalorder %s95, %s97
      %p101 = scmp.eq.s32.totalorder %s19, 0
      %p102 = por %p100, %p101
      %p103 = scmp.ne.s32.totalorder %s95, %s97
      %p104 = scmp.eq.s32.totalorder %s24, 1
      %p105 = por %p103, %p104
      %p106 = scmp.ne.s32.totalorder %s97, %s98
      %p107 = scmp.eq.s32.totalorder %s24, 0
      %p108 = por %p106, %p107
      %p109 = scmp.ne.s32.totalorder %s97, %s98
      %p110 = scmp.eq.s32.totalorder %s25, 1
      %p111 = por %p109, %p110
      %p113 = scmp.ne.s32.totalorder %s98, %s112
      %p114 = scmp.eq.s32.totalorder %s25, 0
      %p115 = por %p113, %p114
      %s117 = sadd.s32 %s116, 1
      %p120 = scmp.eq.s32.totalorder %s19, 1
      %p121 = scmp.ne.s32.totalorder %s116, %s118
      %p122 = scmp.eq.s32.totalorder %s19, 0
      %p123 = por %p121, %p122
      %p124 = scmp.ne.s32.totalorder %s116, %s118
      %p125 = scmp.eq.s32.totalorder %s24, 1
      %p126 = por %p124, %p125
      %p127 = scmp.ne.s32.totalorder %s118, %s119
      %p128 = scmp.eq.s32.totalorder %s24, 0
      %p129 = por %p127, %p128
      %p130 = scmp.ne.s32.totalorder %s118, %s119
      %p131 = scmp.eq.s32.totalorder %s25, 1
      %p132 = por %p130, %p131
      %p134 = scmp.ne.s32.totalorder %s119, %s133
      %p135 = scmp.eq.s32.totalorder %s25, 0
      %p136 = por %p134, %p135
      %s137 = ssub.s32 %s19, %s26
      %p138 = scmp.eq.s32.totalorder %s137, 0
      %s140 = sadd.s32 %s139, 1
      %s141 = scalar_select %p138, %s139, %s140
      %p144 = pneg %p138
      %p145 = scmp.eq.s32.totalorder %s19, 1
      %p146 = por %p144, %p145
      %p147 = scmp.ne.s32.totalorder %s139, %s142
      %p148 = scmp.eq.s32.totalorder %s19, 0
      %p149 = por %p147, %p148
      %p150 = scmp.ne.s32.totalorder %s139, %s142
      %p151 = scmp.eq.s32.totalorder %s24, 1
      %p152 = por %p150, %p151
      %p153 = scmp.ne.s32.totalorder %s142, %s143
      %p154 = scmp.eq.s32.totalorder %s24, 0
      %p155 = por %p153, %p154
      %p156 = scmp.ne.s32.totalorder %s142, %s143
      %p157 = scmp.eq.s32.totalorder %s25, 1
      %p158 = por %p156, %p157
      %p160 = scmp.ne.s32.totalorder %s143, %s159
      %p161 = scmp.eq.s32.totalorder %s25, 0
      %p162 = por %p160, %p161
      %p163 = scmp.le.s32.totalorder 1, %s19
      %p164 = scmp.lt.s32.totalorder %s19, 3
      %p165 = pnand %p163, %p164
      %p166 = pneg %p165
      // Predicated region
      $region9: #{tpu_custom_call.1} parent=5 // pred_check
        _
      $region10: #{tpu_custom_call.1} parent=5 // pred_check_branch
        %168 = sbr.rel (%p165) target = $region12
      $region11: #{tpu_custom_call.1} parent=5 // pred_region
        %s169 = ssub.s32 %s19, 1
        // Predicated region
        $region13: #{tpu_custom_call.1} parent=11 // pred_check
          %p170 = pneg %p66
        $region14: #{tpu_custom_call.1} parent=11 // pred_check_branch
          %172 = sbr.rel (%p170) target = $region16
        $region15: #{tpu_custom_call.1} parent=11 // pred_region
          %s174 = ssub.s32 512, 512
          %175 = vsyncadd [#allocation6], %s174
          %s176 = sshll.u32 [#allocation5], 4
          %s177 = int_to_ptr.vmem [resolvable:$true] %s176
          %182 = dma.hbm_to_vmem [thread:$0]  %s1, 512, %s177, [#allocation6], 128, 128, 8
        $region16: #{tpu_custom_call.1} parent=11 // pred_fallthru
          _
        // Predicated region
        $region17: #{tpu_custom_call.1} parent=11 // pred_check
          %p183 = pneg %p87
        $region18: #{tpu_custom_call.1} parent=11 // pred_check_branch
          %185 = sbr.rel (%p183) target = $region20
        $region19: #{tpu_custom_call.1} parent=11 // pred_region
          %s187 = ssub.s32 512, 512
          %188 = vsyncadd [#allocation6], %s187
          %s189 = sshll.u32 [#allocation7], 4
          %s190 = int_to_ptr.vmem [resolvable:$true] %s189
          %195 = dma.hbm_to_vmem [thread:$0]  %s2, 512, %s190, [#allocation6], 128, 128, 8
        $region20: #{tpu_custom_call.1} parent=11 // pred_fallthru
          _
        // Predicated region
        $region21: #{tpu_custom_call.1} parent=11 // pred_check
          %p196 = pneg %p108
        $region22: #{tpu_custom_call.1} parent=11 // pred_check_branch
          %198 = sbr.rel (%p196) target = $region24
        $region23: #{tpu_custom_call.1} parent=11 // pred_region
          %s200 = ssub.s32 128, 128
          %201 = vsyncadd [#allocation9], %s200
          %s203 = sshll.u32 [#allocation8], 4
          %s204 = int_to_ptr.vmem [resolvable:$true] %s203
          %206 = dma.hbm_to_vmem [thread:$0]  %s3, 128, %s204, [#allocation9]
        $region24: #{tpu_custom_call.1} parent=11 // pred_fallthru
          _
        // Predicated region
        $region25: #{tpu_custom_call.1} parent=11 // pred_check
          %p207 = pneg %p129
        $region26: #{tpu_custom_call.1} parent=11 // pred_check_branch
          %209 = sbr.rel (%p207) target = $region28
        $region27: #{tpu_custom_call.1} parent=11 // pred_region
          %s211 = ssub.s32 128, 128
          %212 = vsyncadd [#allocation9], %s211
          %s214 = sshll.u32 [#allocation10], 4
          %s215 = int_to_ptr.vmem [resolvable:$true] %s214
          %217 = dma.hbm_to_vmem [thread:$0]  %s4, 128, %s215, [#allocation9]
        $region28: #{tpu_custom_call.1} parent=11 // pred_fallthru
          _
      $region12: #{tpu_custom_call.1} parent=5 // pred_fallthru
        _
      %p218 = scmp.lt.s32.totalorder %s19, 2
      // Predicated region
      $region29: #{tpu_custom_call.1} parent=5 // pred_check
        %p219 = pneg %p218
      $region30: #{tpu_custom_call.1} parent=5 // pred_check_branch
        %221 = sbr.rel (%p219) target = $region32
      $region31: #{tpu_custom_call.1} parent=5 // pred_region
        // Predicated region
        $region33: #{tpu_custom_call.1} parent=31 // pred_check
          %p222 = pneg %p39
        $region34: #{tpu_custom_call.1} parent=31 // pred_check_branch
          %224 = sbr.rel (%p222) target = $region36
        $region35: #{tpu_custom_call.1} parent=31 // pred_region
          %s225 = sand.u32 %s29, 1
          %s226 = scalar_lea.sflag [#allocation3], %s225
          %s227 = sand.u32 %s29, 1
          %s228 = smul.addr %s227, 8
          %s229 = scalar_lea.vmem [#allocation2], %s228
          %s231 = ssub.s32 128, 128
          %232 = vsyncadd %s226, %s231
          %s233 = smul.addr %s19, 128
          %s234 = scalar_lea.hbm %s0, %s233
          %s236 = sshll.u32 %s229, 4
          %s237 = int_to_ptr.vmem [resolvable:$true] %s236
          %239 = dma.hbm_to_vmem [thread:$0]  %s234, 128, %s237, %s226
        $region36: #{tpu_custom_call.1} parent=31 // pred_fallthru
          _
      $region32: #{tpu_custom_call.1} parent=5 // pred_fallthru
        _
      %p240 = scmp.le.s32.totalorder 1, %s19
      %p241 = scmp.lt.s32.totalorder %s19, 3
      %p242 = pnand %p240, %p241
      %p243 = pneg %p242
      // Predicated region
      $region37: #{tpu_custom_call.1} parent=5 // pred_check
        _
      $region38: #{tpu_custom_call.1} parent=5 // pred_check_branch
        %245 = sbr.rel (%p242) target = $region40
      $region39: #{tpu_custom_call.1} parent=5 // pred_region
        %s246 = ssub.s32 %s19, 1
        %s247 = sand.u32 %s32, 1
        %s248 = scalar_lea.sflag [#allocation3], %s247
        %s249 = sand.u32 %s32, 1
        %s250 = smul.addr %s249, 8
        %s251 = scalar_lea.vmem [#allocation2], %s250
        // Predicated region
        $region41: #{tpu_custom_call.1} parent=39 // pred_check
          %p252 = pneg %p45
        $region42: #{tpu_custom_call.1} parent=39 // pred_check_branch
          %254 = sbr.rel (%p252) target = $region44
        $region43: #{tpu_custom_call.1} parent=39 // pred_region
          %255 = dma.done %s248, 128
        $region44: #{tpu_custom_call.1} parent=39 // pred_fallthru
          _
        // Predicated region
        $region45: #{tpu_custom_call.1} parent=39 // pred_check
          %p256 = pneg %p66
        $region46: #{tpu_custom_call.1} parent=39 // pred_check_branch
          %258 = sbr.rel (%p256) target = $region48
        $region47: #{tpu_custom_call.1} parent=39 // pred_region
          %259 = dma.done [#allocation6], 512
        $region48: #{tpu_custom_call.1} parent=39 // pred_fallthru
          _
        // Predicated region
        $region49: #{tpu_custom_call.1} parent=39 // pred_check
          %p260 = pneg %p87
        $region50: #{tpu_custom_call.1} parent=39 // pred_check_branch
          %262 = sbr.rel (%p260) target = $region52
        $region51: #{tpu_custom_call.1} parent=39 // pred_region
          %263 = dma.done [#allocation6], 512
        $region52: #{tpu_custom_call.1} parent=39 // pred_fallthru
          _
        // Predicated region
        $region53: #{tpu_custom_call.1} parent=39 // pred_check
          %p264 = pneg %p108
        $region54: #{tpu_custom_call.1} parent=39 // pred_check_branch
          %266 = sbr.rel (%p264) target = $region56
        $region55: #{tpu_custom_call.1} parent=39 // pred_region
          %267 = dma.done [#allocation9], 128
        $region56: #{tpu_custom_call.1} parent=39 // pred_fallthru
          _
        // Predicated region
        $region57: #{tpu_custom_call.1} parent=39 // pred_check
          %p268 = pneg %p129
        $region58: #{tpu_custom_call.1} parent=39 // pred_check_branch
          %270 = sbr.rel (%p268) target = $region60
        $region59: #{tpu_custom_call.1} parent=39 // pred_region
          %271 = dma.done [#allocation9], 128
        $region60: #{tpu_custom_call.1} parent=39 // pred_fallthru
          _
        %s272 = sand.u32 %s32, 1
        %s273 = scalar_lea.sflag [#allocation3], %s272
        %s274 = sand.u32 %s32, 1
        %s275 = smul.addr %s274, 8
        %s276 = scalar_lea.vmem [#allocation2], %s275
        %p277 = pneg %p45
        %p278 = pneg %p42
        %p279 = pneg %p66
        %p280 = pneg %p63
        %p281 = pneg %p87
        %p282 = pneg %p84
        %p283 = pneg %p108
        %p284 = pneg %p105
        %p285 = pneg %p129
        %p286 = pneg %p126
        %p287 = pneg %p155
        %p288 = pneg %p152
        %s289 = sand.u32 %s142, 1
        %s290 = scalar_lea.sflag [#allocation4], %s289
        %s291 = sand.u32 %s142, 1
        %s292 = smul.addr %s291, 8
        %s293 = scalar_lea.vmem [#allocation11], %s292
        %v294 = vld [vmem:[#allocation5] sm:$0xff]
        %v295 = vld [vmem:[#allocation5 + $0x8] sm:$0xff]
        %v296 = vld [vmem:[#allocation5 + $0x10] sm:$0xff]
        %v297 = vld [vmem:[#allocation5 + $0x18] sm:$0xff]
        %v298 = vld [vmem:[#allocation7] sm:$0xff]
        %v299 = vld [vmem:[#allocation7 + $0x8] sm:$0xff]
        %v300 = vld [vmem:[#allocation7 + $0x10] sm:$0xff]
        %v301 = vld [vmem:[#allocation7 + $0x18] sm:$0xff]
        %v302 = vld [vmem:[#allocation8] sm:$0xff]
        %v303 = vld [vmem:[#allocation10] sm:$0xff]
        %v304 = vld [vmem:[%s251] sm:$0xff]
        %vm305 = vcmask 261120
        %v307 = vsel %vm305, %v304, 0
        %309 = vmatprep.subr.mxu0 0.0
        %310 = vmatpush1.msra.mxu0 %v294
        %311 = vmatprep.subr.mxu0 0.0
        %312 = vmatpush1.msra.mxu0 %v295
        %313 = vmatprep.subr.mxu0 0.0
        %314 = vmatpush1.msra.mxu0 %v296
        %315 = vmatprep.subr.mxu0 0.0
        %316 = vmatpush1.msra.mxu0 %v297
        %317 = vmatprep.subr.mxu0 0.0
        %318 = vmatpush1.msra.mxu0 0.0
        %319 = vmatprep.subr.mxu0 0.0
        %320 = vmatpush1.msra.mxu0 0.0
        %321 = vmatprep.subr.mxu0 0.0
        %322 = vmatpush1.msra.mxu0 0.0
        %323 = vmatprep.subr.mxu0 0.0
        %324 = vmatpush1.msra.mxu0 0.0
        %325 = vmatprep.subr.mxu0 0.0
        %326 = vmatpush1.msra.mxu0 0.0
        %327 = vmatprep.subr.mxu0 0.0
        %328 = vmatpush1.msra.mxu0 0.0
        %329 = vmatprep.subr.mxu0 0.0
        %330 = vmatpush1.msra.mxu0 0.0
        %331 = vmatprep.subr.mxu0 0.0
        %332 = vmatpush1.msra.mxu0 0.0
        %333 = vmatprep.subr.mxu0 0.0
        %334 = vmatpush1.msra.mxu0 0.0
        %335 = vmatprep.subr.mxu0 0.0
        %336 = vmatpush1.msra.mxu0 0.0
        %337 = vmatprep.subr.mxu0 0.0
        %338 = vmatpush1.msra.mxu0 0.0
        %339 = vmatprep.subr.mxu0 0.0
        %340 = vmatpush1.msra.mxu0 0.0
        %341 = vmatprep.subr.mxu0 0.0
        %342 = vmatpush1.msra.mxu0 0.0
        %343 = vmatprep.subr.mxu0 0.0
        %344 = vmatpush1.msra.mxu0 0.0
        %345 = vmatprep.subr.mxu0 0.0
        %346 = vmatpush1.msra.mxu0 0.0
        %347 = vmatprep.subr.mxu0 0.0
        %348 = vmatpush1.msra.mxu0 0.0
        %349 = vmatprep.subr.mxu0 0.0
        %350 = vmatpush1.msra.mxu0 0.0
        %351 = vmatprep.subr.mxu0 0.0
        %352 = vmatpush1.msra.mxu0 0.0
        %353 = vmatprep.subr.mxu0 0.0
        %354 = vmatpush1.msra.mxu0 0.0
        %355 = vmatprep.subr.mxu0 0.0
        %356 = vmatpush1.msra.mxu0 0.0
        %357 = vmatprep.subr.mxu0 0.0
        %358 = vmatpush1.msra.mxu0 0.0
        %359 = vmatprep.subr.mxu0 0.0
        %360 = vmatpush1.msra.mxu0 0.0
        %361 = vmatprep.subr.mxu0 0.0
        %362 = vmatpush1.msra.mxu0 0.0
        %363 = vmatprep.subr.mxu0 0.0
        %364 = vmatpush1.msra.mxu0 0.0
        %365 = vmatprep.subr.mxu0 0.0
        %366 = vmatpush1.msra.mxu0 0.0
        %367 = vmatprep.subr.mxu0 0.0
        %368 = vmatpush1.msra.mxu0 0.0
        %369 = vmatprep.subr.mxu0 0.0
        %370 = vmatpush1.msra.mxu0 0.0
        %371 = vmatprep.subr.mxu0 0.0
        %372 = vmatpush1.msra.mxu0 0.0
        %373 = vmatprep.mubr.f32.mxu0 0.0
        %374 = vmatmul.mubr.f32.gmra.mrb[0].mxu0 %v307
        %v375 = vpop.f32.mrb[0].mxu0
        %v376 = vadd.f32 0.0, %v375
        %v377 = vpop.f32.mrb[0].mxu0
        %378 = vdwg.mxu0
        %379 = vmatprep.subr.mxu0 0.0
        %380 = vmatpush1.msra.mxu0 %v298
        %381 = vmatprep.subr.mxu0 0.0
        %382 = vmatpush1.msra.mxu0 %v299
        %383 = vmatprep.subr.mxu0 0.0
        %384 = vmatpush1.msra.mxu0 %v300
        %385 = vmatprep.subr.mxu0 0.0
        %386 = vmatpush1.msra.mxu0 %v301
        %387 = vmatprep.subr.mxu0 0.0
        %388 = vmatpush1.msra.mxu0 0.0
        %389 = vmatprep.subr.mxu0 0.0
        %390 = vmatpush1.msra.mxu0 0.0
        %391 = vmatprep.subr.mxu0 0.0
        %392 = vmatpush1.msra.mxu0 0.0
        %393 = vmatprep.subr.mxu0 0.0
        %394 = vmatpush1.msra.mxu0 0.0
        %395 = vmatprep.subr.mxu0 0.0
        %396 = vmatpush1.msra.mxu0 0.0
        %397 = vmatprep.subr.mxu0 0.0
        %398 = vmatpush1.msra.mxu0 0.0
        %399 = vmatprep.subr.mxu0 0.0
        %400 = vmatpush1.msra.mxu0 0.0
        %401 = vmatprep.subr.mxu0 0.0
        %402 = vmatpush1.msra.mxu0 0.0
        %403 = vmatprep.subr.mxu0 0.0
        %404 = vmatpush1.msra.mxu0 0.0
        %405 = vmatprep.subr.mxu0 0.0
        %406 = vmatpush1.msra.mxu0 0.0
        %407 = vmatprep.subr.mxu0 0.0
        %408 = vmatpush1.msra.mxu0 0.0
        %409 = vmatprep.subr.mxu0 0.0
        %410 = vmatpush1.msra.mxu0 0.0
        %411 = vmatprep.subr.mxu0 0.0
        %412 = vmatpush1.msra.mxu0 0.0
        %413 = vmatprep.subr.mxu0 0.0
        %414 = vmatpush1.msra.mxu0 0.0
        %415 = vmatprep.subr.mxu0 0.0
        %416 = vmatpush1.msra.mxu0 0.0
        %417 = vmatprep.subr.mxu0 0.0
        %418 = vmatpush1.msra.mxu0 0.0
        %419 = vmatprep.subr.mxu0 0.0
        %420 = vmatpush1.msra.mxu0 0.0
        %421 = vmatprep.subr.mxu0 0.0
        %422 = vmatpush1.msra.mxu0 0.0
        %423 = vmatprep.subr.mxu0 0.0
        %424 = vmatpush1.msra.mxu0 0.0
        %425 = vmatprep.subr.mxu0 0.0
        %426 = vmatpush1.msra.mxu0 0.0
        %427 = vmatprep.subr.mxu0 0.0
        %428 = vmatpush1.msra.mxu0 0.0
        %429 = vmatprep.subr.mxu0 0.0
        %430 = vmatpush1.msra.mxu0 0.0
        %431 = vmatprep.subr.mxu0 0.0
        %432 = vmatpush1.msra.mxu0 0.0
        %433 = vmatprep.subr.mxu0 0.0
        %434 = vmatpush1.msra.mxu0 0.0
        %435 = vmatprep.subr.mxu0 0.0
        %436 = vmatpush1.msra.mxu0 0.0
        %437 = vmatprep.subr.mxu0 0.0
        %438 = vmatpush1.msra.mxu0 0.0
        %439 = vmatprep.subr.mxu0 0.0
        %440 = vmatpush1.msra.mxu0 0.0
        %441 = vmatprep.subr.mxu0 0.0
        %442 = vmatpush1.msra.mxu0 0.0
        %443 = vmatprep.mubr.f32.mxu0 0.0
        %444 = vmatmul.mubr.f32.gmra.mrb[0].mxu0 %v307
        %v445 = vpop.f32.mrb[0].mxu0
        %v446 = vadd.f32 0.0, %v445
        %v447 = vpop.f32.mrb[0].mxu0
        %448 = vdwg.mxu0
        %vm449 = vcmask 64512
        %v451 = vsel %vm449, %v303, 0
        %453 = vmatprep.subr.mxu0 0.0
        %454 = vmatpush1.msra.mxu0 %v446
        %455 = vmatprep.subr.mxu0 0.0
        %456 = vmatpush1.msra.mxu0 0.0
        %457 = vmatprep.subr.mxu0 0.0
        %458 = vmatpush1.msra.mxu0 0.0
        %459 = vmatprep.subr.mxu0 0.0
        %460 = vmatpush1.msra.mxu0 0.0
        %461 = vmatprep.subr.mxu0 0.0
        %462 = vmatpush1.msra.mxu0 0.0
        %463 = vmatprep.subr.mxu0 0.0
        %464 = vmatpush1.msra.mxu0 0.0
        %465 = vmatprep.subr.mxu0 0.0
        %466 = vmatpush1.msra.mxu0 0.0
        %467 = vmatprep.subr.mxu0 0.0
        %468 = vmatpush1.msra.mxu0 0.0
        %469 = vmatprep.subr.mxu0 0.0
        %470 = vmatpush1.msra.mxu0 0.0
        %471 = vmatprep.subr.mxu0 0.0
        %472 = vmatpush1.msra.mxu0 0.0
        %473 = vmatprep.subr.mxu0 0.0
        %474 = vmatpush1.msra.mxu0 0.0
        %475 = vmatprep.subr.mxu0 0.0
        %476 = vmatpush1.msra.mxu0 0.0
        %477 = vmatprep.subr.mxu0 0.0
        %478 = vmatpush1.msra.mxu0 0.0
        %479 = vmatprep.subr.mxu0 0.0
        %480 = vmatpush1.msra.mxu0 0.0
        %481 = vmatprep.subr.mxu0 0.0
        %482 = vmatpush1.msra.mxu0 0.0
        %483 = vmatprep.subr.mxu0 0.0
        %484 = vmatpush1.msra.mxu0 0.0
        %485 = vmatprep.subr.mxu0 0.0
        %486 = vmatpush1.msra.mxu0 0.0
        %487 = vmatprep.subr.mxu0 0.0
        %488 = vmatpush1.msra.mxu0 0.0
        %489 = vmatprep.subr.mxu0 0.0
        %490 = vmatpush1.msra.mxu0 0.0
        %491 = vmatprep.subr.mxu0 0.0
        %492 = vmatpush1.msra.mxu0 0.0
        %493 = vmatprep.subr.mxu0 0.0
        %494 = vmatpush1.msra.mxu0 0.0
        %495 = vmatprep.subr.mxu0 0.0
        %496 = vmatpush1.msra.mxu0 0.0
        %497 = vmatprep.subr.mxu0 0.0
        %498 = vmatpush1.msra.mxu0 0.0
        %499 = vmatprep.subr.mxu0 0.0
        %500 = vmatpush1.msra.mxu0 0.0
        %501 = vmatprep.subr.mxu0 0.0
        %502 = vmatpush1.msra.mxu0 0.0
        %503 = vmatprep.subr.mxu0 0.0
        %504 = vmatpush1.msra.mxu0 0.0
        %505 = vmatprep.subr.mxu0 0.0
        %506 = vmatpush1.msra.mxu0 0.0
        %507 = vmatprep.subr.mxu0 0.0
        %508 = vmatpush1.msra.mxu0 0.0
        %509 = vmatprep.subr.mxu0 0.0
        %510 = vmatpush1.msra.mxu0 0.0
        %511 = vmatprep.subr.mxu0 0.0
        %512 = vmatpush1.msra.mxu0 0.0
        %513 = vmatprep.subr.mxu0 0.0
        %514 = vmatpush1.msra.mxu0 0.0
        %515 = vmatprep.subr.mxu0 0.0
        %516 = vmatpush1.msra.mxu0 0.0
        %517 = vmatprep.mubr.f32.mxu0 0.0
        %518 = vmatmul.mubr.f32.gmra.mrb[0].mxu0 %v451
        %v519 = vpop.f32.mrb[0].mxu0
        %v520 = vadd.f32 0.0, %v519
        %v521 = vpop.f32.mrb[0].mxu0
        %522 = vdwg.mxu0
        %v524 = vsel %vm449, %v302, 0
        %526 = vmatprep.subr.mxu0 0.0
        %527 = vmatpush1.msra.mxu0 %v376
        %528 = vmatprep.subr.mxu0 0.0
        %529 = vmatpush1.msra.mxu0 0.0
        %530 = vmatprep.subr.mxu0 0.0
        %531 = vmatpush1.msra.mxu0 0.0
        %532 = vmatprep.subr.mxu0 0.0
        %533 = vmatpush1.msra.mxu0 0.0
        %534 = vmatprep.subr.mxu0 0.0
        %535 = vmatpush1.msra.mxu0 0.0
        %536 = vmatprep.subr.mxu0 0.0
        %537 = vmatpush1.msra.mxu0 0.0
        %538 = vmatprep.subr.mxu0 0.0
        %539 = vmatpush1.msra.mxu0 0.0
        %540 = vmatprep.subr.mxu0 0.0
        %541 = vmatpush1.msra.mxu0 0.0
        %542 = vmatprep.subr.mxu0 0.0
        %543 = vmatpush1.msra.mxu0 0.0
        %544 = vmatprep.subr.mxu0 0.0
        %545 = vmatpush1.msra.mxu0 0.0
        %546 = vmatprep.subr.mxu0 0.0
        %547 = vmatpush1.msra.mxu0 0.0
        %548 = vmatprep.subr.mxu0 0.0
        %549 = vmatpush1.msra.mxu0 0.0
        %550 = vmatprep.subr.mxu0 0.0
        %551 = vmatpush1.msra.mxu0 0.0
        %552 = vmatprep.subr.mxu0 0.0
        %553 = vmatpush1.msra.mxu0 0.0
        %554 = vmatprep.subr.mxu0 0.0
        %555 = vmatpush1.msra.mxu0 0.0
        %556 = vmatprep.subr.mxu0 0.0
        %557 = vmatpush1.msra.mxu0 0.0
        %558 = vmatprep.subr.mxu0 0.0
        %559 = vmatpush1.msra.mxu0 0.0
        %560 = vmatprep.subr.mxu0 0.0
        %561 = vmatpush1.msra.mxu0 0.0
        %562 = vmatprep.subr.mxu0 0.0
        %563 = vmatpush1.msra.mxu0 0.0
        %564 = vmatprep.subr.mxu0 0.0
        %565 = vmatpush1.msra.mxu0 0.0
        %566 = vmatprep.subr.mxu0 0.0
        %567 = vmatpush1.msra.mxu0 0.0
        %568 = vmatprep.subr.mxu0 0.0
        %569 = vmatpush1.msra.mxu0 0.0
        %570 = vmatprep.subr.mxu0 0.0
        %571 = vmatpush1.msra.mxu0 0.0
        %572 = vmatprep.subr.mxu0 0.0
        %573 = vmatpush1.msra.mxu0 0.0
        %574 = vmatprep.subr.mxu0 0.0
        %575 = vmatpush1.msra.mxu0 0.0
        %576 = vmatprep.subr.mxu0 0.0
        %577 = vmatpush1.msra.mxu0 0.0
        %578 = vmatprep.subr.mxu0 0.0
        %579 = vmatpush1.msra.mxu0 0.0
        %580 = vmatprep.subr.mxu0 0.0
        %581 = vmatpush1.msra.mxu0 0.0
        %582 = vmatprep.subr.mxu0 0.0
        %583 = vmatpush1.msra.mxu0 0.0
        %584 = vmatprep.subr.mxu0 0.0
        %585 = vmatpush1.msra.mxu0 0.0
        %586 = vmatprep.subr.mxu0 0.0
        %587 = vmatpush1.msra.mxu0 0.0
        %588 = vmatprep.subr.mxu0 0.0
        %589 = vmatpush1.msra.mxu0 0.0
        %590 = vmatprep.mubr.f32.mxu0 0.0
        %591 = vmatmul.mubr.f32.gmra.mrb[0].mxu0 %v524
        %v592 = vpop.f32.mrb[0].mxu0
        %v593 = vadd.f32 %v520, %v592
        %v594 = vpop.f32.mrb[0].mxu0
        %595 = vdwg.mxu0
        %596 = vst.msk [vmem:[%s293] sm:$0xff] %vm305, %v593
        %s597 = sand.u32 %s142, 1
        %s598 = scalar_lea.sflag [#allocation4], %s597
        %s599 = sand.u32 %s142, 1
        %s600 = smul.addr %s599, 8
        %s601 = scalar_lea.vmem [#allocation11], %s600
        // Predicated region
        $region61: #{tpu_custom_call.1} parent=39 // pred_check
          %p602 = pneg %p152
        $region62: #{tpu_custom_call.1} parent=39 // pred_check_branch
          %604 = sbr.rel (%p602) target = $region64
        $region63: #{tpu_custom_call.1} parent=39 // pred_region
          %s606 = ssub.s32 128, 128
          %607 = vsyncadd %s598, %s606
          %s608 = smul.addr %s24, 128
          %s609 = scalar_lea.hbm %s5, %s608
          %s611 = sshll.u32 %s601, 4
          %s612 = int_to_ptr.vmem [resolvable:$true] %s611
          %614 = dma.vmem_to_hbm [thread:$0]  %s612, 128, %s609, %s598
        $region64: #{tpu_custom_call.1} parent=39 // pred_fallthru
          _
      $region40: #{tpu_custom_call.1} parent=5 // pred_fallthru
        _
      %p615 = scmp.le.s32.totalorder 2, %s19
      // Predicated region
      $region65: #{tpu_custom_call.1} parent=5 // pred_check
        %p616 = pneg %p615
      $region66: #{tpu_custom_call.1} parent=5 // pred_check_branch
        %618 = sbr.rel (%p616) target = $region68
      $region67: #{tpu_custom_call.1} parent=5 // pred_region
        %s619 = ssub.s32 %s19, 2
        // Predicated region
        $region69: #{tpu_custom_call.1} parent=67 // pred_check
          %p620 = pneg %p158
        $region70: #{tpu_custom_call.1} parent=67 // pred_check_branch
          %622 = sbr.rel (%p620) target = $region72
        $region71: #{tpu_custom_call.1} parent=67 // pred_region
          %s623 = sand.u32 %s143, 1
          %s624 = scalar_lea.sflag [#allocation4], %s623
          %s625 = sand.u32 %s143, 1
          %s626 = smul.addr %s625, 8
          %s627 = scalar_lea.vmem [#allocation11], %s626
          %628 = dma.done %s624, 128
        $region72: #{tpu_custom_call.1} parent=67 // pred_fallthru
          _
      $region68: #{tpu_custom_call.1} parent=5 // pred_fallthru
        _
    $region6: #{tpu_custom_call.1} parent=1 // loop_footer
      %s23 = sadd.s32 1, %s19
    $region7: #{tpu_custom_call.1} parent=1 // loop_footer_branch
      %18 = sbr.rel target = $region3
    $region8: #{tpu_custom_call.1} parent=1 // loop_exit
      _
    %629 = vsyncpa [#allocation3], 1
    %s630 = scalar_lea.sflag [#allocation3], 1
    %631 = vsyncpa %s630, 1
    %632 = vsyncpa [#allocation6], 1
    %633 = vsyncpa [#allocation9], 1
    %634 = vsyncpa [#allocation4], 1
    %s635 = scalar_lea.sflag [#allocation4], 1
    %636 = vsyncpa %s635, 1

</llo_original>
